<compile_context>
chip_gen: v6e
topology: v6e:2x2x1
jax: 0.10.0
libtpu: 0.0.40
codegen_flags: <defaults>
</compile_context>

<pallas_src>
import math
import jax
import jax.numpy as jnp
from jax.experimental import pallas as pl
from jax.experimental.pallas import tpu as pltpu

_SUBLANE = 8
_TARGET_TILE_BYTES = 2 * 1024 * 1024     # per-buffer tile target (double-buffered)
_TARGET_GRID_STEPS = 8                   # keep >=8 even steps for 2-TC sharding
_SMALL_INPUT_BYTES = 64 * 1024           # below this, fused XLA beats a launch


def _topk_score_kernel(x_ref, s_ref, o_ref):
    # x_ref: (tm, F) row tile of node embeddings (input dtype)
    # s_ref: (F, 1)  unit-norm scorer, f32
    x = x_ref[...]
    s = s_ref[...]
    # MXU matvec with f32 accumulation: scores = x @ s_unit -> (tm, 1)
    scores = jnp.dot(x, s, preferred_element_type=jnp.float32)
    w = jnp.tanh(scores).astype(x.dtype)          # (tm, 1) broadcast weight
    o_ref[...] = (x * w).astype(o_ref.dtype)


def _round_up(v, m):
    return ((v + m - 1) // m) * m


def _pick_tile_rows(n_rows, bytes_per_row):
    """Row tile: <= ~2 MiB per buffer, multiple of 8, and >= ~8 grid steps."""
    if n_rows <= _SUBLANE:
        return n_rows  # single full-extent block (exempt from 8-divisibility)
    tm_bw = max(_SUBLANE,
                (_TARGET_TILE_BYTES // max(bytes_per_row, 1)) // _SUBLANE * _SUBLANE)
    tm_par = _round_up(pl.cdiv(n_rows, _TARGET_GRID_STEPS), _SUBLANE)
    tm = max(_SUBLANE, min(tm_bw, tm_par))
    if n_rows <= tm:
        return n_rows  # single full-extent block
    return tm


def topk_weighted_embs(x, s_unit):
    """Pallas hot path: out = x * tanh(x @ s_unit), streamed by row tiles."""
    rows, feats = x.shape
    itemsize = jnp.dtype(x.dtype).itemsize
    tm = _pick_tile_rows(rows, feats * itemsize)
    grid = (pl.cdiv(rows, tm),)

    return pl.pallas_call(
        _topk_score_kernel,
        out_shape=jax.ShapeDtypeStruct((rows, feats), x.dtype),
        grid=grid,
        in_specs=[
            pl.BlockSpec((tm, feats), lambda i: (i, 0)),   # row tile (pipelined)
            pl.BlockSpec((feats, 1), lambda i: (0, 0)),    # scorer, constant block
        ],
        out_specs=pl.BlockSpec((tm, feats), lambda i: (i, 0)),
        compiler_params=pltpu.CompilerParams(
            dimension_semantics=("parallel",),   # shard row tiles across TCs (v7x)
            vmem_limit_bytes=32 * 1024 * 1024,   # headroom over double-buffered tiles
        ),
    )(x, s_unit)


def topk_forward(node_embs, scorer, k):
    """Full TopK.forward semantics (no actual sorting, matching PyTorch)."""
    N, F = node_embs.shape

    # Rows >= k are never returned: don't read, compute, or write them.
    rows = min(N, k)
    x = node_embs[:rows]

    # Hoisted out of the kernel: normalize the scorer once (f32).
    # (A zero-norm scorer yields inf/NaN exactly like the PyTorch reference.)
    s_unit = scorer.reshape(F, 1).astype(jnp.float32)
    s_unit = s_unit / jnp.linalg.norm(s_unit)

    if rows * F * jnp.dtype(node_embs.dtype).itemsize < _SMALL_INPUT_BYTES:
        # Small-input fallback: fused XLA elementwise+reduce, no kernel launch.
        scores = jnp.dot(x.astype(jnp.float32), s_unit)
        out = x * jnp.tanh(scores).astype(x.dtype)
    else:
        out = topk_weighted_embs(x, s_unit)      # (rows, F)

    if N < k:
        # node_embs[-1] * tanh(scores[-1]) is exactly the last row of `out`.
        pad = jnp.repeat(out[-1:], k - N, axis=0)
        out = jnp.concatenate([out, pad], axis=0)
    return out                                   # (k, F)


def init_scorer(key, feats):
    stdv = 1.0 / math.sqrt(feats)
    return jax.random.uniform(
        key, (feats, 1), dtype=jnp.float32, minval=-stdv, maxval=stdv
    )


if __name__ == "__main__":
    key = jax.random.PRNGKey(0)
    k_emb, k_scorer, k_big, k_big2 = jax.random.split(key, 4)

    feats = 32
    scorer = init_scorer(k_scorer, feats)

    def reference(x, s, k):
        scores = x @ s / jnp.linalg.norm(s)
        out = x * jnp.tanh(scores)
        n = x.shape[0]
        if n < k:
            out = jnp.concatenate([out, jnp.repeat(out[-1:], k - n, axis=0)], 0)
        return out[:k]

    # Case 1: tiny input, N >= k (small-input fallback path)
    N, k = 16, 8
    x1 = jax.random.normal(k_emb, (N, feats), dtype=jnp.float32)
    out1 = jax.block_until_ready(topk_forward(x1, scorer, k))
    assert out1.shape == (k, feats), out1.shape
    assert jnp.allclose(out1, reference(x1, scorer, k), atol=1e-5, rtol=1e-5)

    # Case 2: tiny input, N < k padding branch (fallback path)
    N2, k2 = 4, 8
    x2 = jax.random.normal(k_emb, (N2, feats), dtype=jnp.float32)
    out2 = jax.block_until_ready(topk_forward(x2, scorer, k2))
    assert out2.shape == (k2, feats), out2.shape
    assert jnp.allclose(out2, reference(x2, scorer, k2), atol=1e-5, rtol=1e-5)

    # Case 3: Pallas multi-tile path, N > k, non-divisible row count
    N3, k3 = 5000, 4000
    x3 = jax.random.normal(k_big, (N3, feats), dtype=jnp.float32)
    out3 = jax.block_until_ready(topk_forward(x3, scorer, k3))
    assert out3.shape == (k3, feats), out3.shape
    assert jnp.allclose(out3, reference(x3, scorer, k3), atol=1e-5, rtol=1e-5)

    # Case 4: Pallas multi-tile path, N < k padding branch
    N4, k4 = 3000, 3500
    x4 = jax.random.normal(k_big2, (N4, feats), dtype=jnp.float32)
    out4 = jax.block_until_ready(topk_forward(x4, scorer, k4))
    assert out4.shape == (k4, feats), out4.shape
    assert jnp.allclose(out4, reference(x4, scorer, k4), atol=1e-5, rtol=1e-5)

    print("KERNEL_OK")
</pallas_src>

<mosaic_0001>
module attributes {stable_mosaic.version = 11 : i64} {
  func.func @_topk_score_kernel(%arg0: i32, %arg1: memref<504x32xf32, #tpu.memory_space<vmem>>, %arg2: memref<32x1xf32, #tpu.memory_space<vmem>>, %arg3: memref<504x32xf32, #tpu.memory_space<vmem>>) attributes {dimension_semantics = [#tpu.dimension_semantics<parallel>], iteration_bounds = array<i64: 8>, scalar_prefetch = 0 : i64, scratch_operands = 0 : i64, tpu.core_type = #tpu.core_type<tc>, window_params = [{transform_indices = @transform_0, window_bounds = array<i64: 504, 32>}, {pipeline_mode = #tpu.pipeline_mode<synchronous>, transform_indices = @transform_1, window_bounds = array<i64: 32, 1>}, {transform_indices = @transform_2, window_bounds = array<i64: 504, 32>}]} {
    %c0 = arith.constant 0 : index
    %c0_0 = arith.constant 0 : index
    %0 = vector.load %arg1[%c0, %c0_0] : memref<504x32xf32, #tpu.memory_space<vmem>>, vector<504x32xf32>
    %c0_1 = arith.constant 0 : index
    %c0_2 = arith.constant 0 : index
    %1 = vector.load %arg2[%c0_1, %c0_2] : memref<32x1xf32, #tpu.memory_space<vmem>>, vector<32x1xf32>
    %cst = arith.constant dense<0.000000e+00> : vector<504x1xf32>
    %2 = tpu.matmul %0, %1, %cst {dimension_numbers = #tpu.dot_dimension_numbers<[1], [0], [0], [1], [0, 0, 1, 1], [], []>} : vector<504x32xf32>, vector<32x1xf32>, vector<504x1xf32> -> vector<504x1xf32>
    %3 = math.tanh %2 : vector<504x1xf32>
    %4 = vector.broadcast %3 : vector<504x1xf32> to vector<504x32xf32>
    %5 = arith.mulf %0, %4 : vector<504x32xf32>
    %c0_3 = arith.constant 0 : index
    %c0_4 = arith.constant 0 : index
    %6 = vector.load %arg3[%c0_3, %c0_4] : memref<504x32xf32, #tpu.memory_space<vmem>>, vector<504x32xf32>
    tpu.vector_store %arg3[%c0_3, %c0_4], %5 {strides = array<i32>} : memref<504x32xf32, #tpu.memory_space<vmem>>, vector<504x32xf32>,
    return
  }
  func.func @transform_0(%arg0: i32) -> (i32, i32) {
    %c0_i32 = arith.constant 0 : i32
    %c0_i32_0 = arith.constant 0 : i32
    return %arg0, %c0_i32 : i32, i32
  }
  func.func @transform_1(%arg0: i32) -> (i32, i32) {
    %c0_i32 = arith.constant 0 : i32
    %c0_i32_0 = arith.constant 0 : i32
    %c0_i32_1 = arith.constant 0 : i32
    return %c0_i32, %c0_i32_0 : i32, i32
  }
  func.func @transform_2(%arg0: i32) -> (i32, i32) {
    %c0_i32 = arith.constant 0 : i32
    %c0_i32_0 = arith.constant 0 : i32
    return %arg0, %c0_i32 : i32, i32
  }
}

</mosaic_0001>

<llo_original>
// kernel: tpu_custom_call.1
$region0: #{tpu_custom_call.1}
  #allocation0 [shape = 'u32[]', space=smem, size = 0x4, offset = 0x4, fixed_abs, tag = 'smem constant byte address 0x4 - core index']
  #allocation1 [shape = 'u32[144,128]{1,0:T(1,128)}', space=vmem, size = 0x12000, scoped, tag = 'internal scratch']
  %s0 = inlined_call_operand.vmem [shape: f32[4000,32], index: 0, kind: input, shape index: {}]
  %s1 = inlined_call_operand.vmem [shape: f32[32,1], index: 1, kind: input, shape index: {}]
  %s2 = inlined_call_operand.vmem [shape: f32[4000,32], index: 2, kind: output, shape index: {}]
  %s3 = sld [smem:[#allocation0]]
  $region89: #{tpu_custom_call.1} parent=0
    _
  %s5 = ssub.s32 1, %s3
  %s6 = scalar_select 0, %s5, %s3
  $region1: #{tpu_custom_call.1} parent=0
    #allocation2 [shape = 'u8[516096]{0}', space=vmem, size = 0x7e000, scoped, tag = 'output window, operand 0']
    loop: start=0, step=1, limit=10
    $region2: #{tpu_custom_call.1} parent=1 // loop_pre_header
      _
    $region3: #{tpu_custom_call.1} parent=1 // loop_header
      %s8 = sphi 0, %s12
      %p9 = scmp.ge.s32.totalorder %s8, 10
      %s18 = sphi 0, %s20
      %s21 = sphi 0, %s18
      %s22 = sphi 0, %s21
      %s38 = sphi 0, %s22
      %s42 = sphi 0, %s42
      %s44 = sphi 0, %s42
      %s45 = sphi 0, %s44
      %s59 = sphi 0, %s45
      %s65 = sphi 0, %s67
      %s68 = sphi 0, %s65
      %s69 = sphi 0, %s68
      %s85 = sphi 0, %s69
    $region4: #{tpu_custom_call.1} parent=1 // loop_header_branch
      %11 = sbr.rel (%p9) target = $region8
    $region5: #{tpu_custom_call.1} parent=1 // loop_body
      %s13 = ssub.s32 %s8, 1
      %s14 = ssub.s32 %s8, 2
      %s15 = sadd.s32 %s8, 1
      %s16 = ssub.s32 %s8, %s15
      %p17 = scmp.eq.s32.totalorder %s16, 0
      %s19 = sadd.s32 %s18, 1
      %s20 = scalar_select %p17, %s18, %s19
      %p23 = pneg %p17
      %p24 = scmp.eq.s32.totalorder %s8, 7
      %p25 = por %p23, %p24
      %p26 = scmp.ne.s32.totalorder %s18, %s21
      %p27 = scmp.eq.s32.totalorder %s8, 0
      %p28 = por %p26, %p27
      %p29 = scmp.ne.s32.totalorder %s18, %s21
      %p30 = scmp.eq.s32.totalorder %s13, 7
      %p31 = por %p29, %p30
      %p32 = scmp.ne.s32.totalorder %s21, %s22
      %p33 = scmp.eq.s32.totalorder %s13, 0
      %p34 = por %p32, %p33
      %p35 = scmp.ne.s32.totalorder %s21, %s22
      %p36 = scmp.eq.s32.totalorder %s14, 7
      %p37 = por %p35, %p36
      %p39 = scmp.ne.s32.totalorder %s22, %s38
      %p40 = scmp.eq.s32.totalorder %s14, 0
      %p41 = por %p39, %p40
      %s43 = sadd.s32 %s42, 1
      %p46 = scmp.eq.s32.totalorder %s8, 7
      %p47 = scmp.ne.s32.totalorder %s42, %s44
      %p48 = scmp.eq.s32.totalorder %s8, 0
      %p49 = por %p47, %p48
      %p50 = scmp.ne.s32.totalorder %s42, %s44
      %p51 = scmp.eq.s32.totalorder %s13, 7
      %p52 = por %p50, %p51
      %p53 = scmp.ne.s32.totalorder %s44, %s45
      %p54 = scmp.eq.s32.totalorder %s13, 0
      %p55 = por %p53, %p54
      %p56 = scmp.ne.s32.totalorder %s44, %s45
      %p57 = scmp.eq.s32.totalorder %s14, 7
      %p58 = por %p56, %p57
      %p60 = scmp.ne.s32.totalorder %s45, %s59
      %p61 = scmp.eq.s32.totalorder %s14, 0
      %p62 = por %p60, %p61
      %s63 = ssub.s32 %s8, %s15
      %p64 = scmp.eq.s32.totalorder %s63, 0
      %s66 = sadd.s32 %s65, 1
      %s67 = scalar_select %p64, %s65, %s66
      %p70 = pneg %p64
      %p71 = scmp.eq.s32.totalorder %s8, 7
      %p72 = por %p70, %p71
      %p73 = scmp.ne.s32.totalorder %s65, %s68
      %p74 = scmp.eq.s32.totalorder %s8, 0
      %p75 = por %p73, %p74
      %p76 = scmp.ne.s32.totalorder %s65, %s68
      %p77 = scmp.eq.s32.totalorder %s13, 7
      %p78 = por %p76, %p77
      %p79 = scmp.ne.s32.totalorder %s68, %s69
      %p80 = scmp.eq.s32.totalorder %s13, 0
      %p81 = por %p79, %p80
      %p82 = scmp.ne.s32.totalorder %s68, %s69
      %p83 = scmp.eq.s32.totalorder %s14, 7
      %p84 = por %p82, %p83
      %p86 = scmp.ne.s32.totalorder %s69, %s85
      %p87 = scmp.eq.s32.totalorder %s14, 0
      %p88 = por %p86, %p87
      %p89 = scmp.le.s32.totalorder 1, %s8
      %p90 = scmp.lt.s32.totalorder %s8, 9
      %p91 = pnand %p89, %p90
      %p92 = pneg %p91
      // Predicated region
      $region9: #{tpu_custom_call.1} parent=5 // pred_check
        _
      $region10: #{tpu_custom_call.1} parent=5 // pred_check_branch
        %94 = sbr.rel (%p91) target = $region12
      $region11: #{tpu_custom_call.1} parent=5 // pred_region
        %s95 = ssub.s32 %s8, 1
        // Predicated region
        $region13: #{tpu_custom_call.1} parent=11 // pred_check
          %p96 = pneg %p55
        $region14: #{tpu_custom_call.1} parent=11 // pred_check_branch
          %98 = sbr.rel (%p96) target = $region16
        $region15: #{tpu_custom_call.1} parent=11 // pred_region
          _
        $region16: #{tpu_custom_call.1} parent=11 // pred_fallthru
          _
      $region12: #{tpu_custom_call.1} parent=5 // pred_fallthru
        _
      %p99 = scmp.lt.s32.totalorder %s8, 8
      // Predicated region
      $region17: #{tpu_custom_call.1} parent=5 // pred_check
        %p100 = pneg %p99
      $region18: #{tpu_custom_call.1} parent=5 // pred_check_branch
        %102 = sbr.rel (%p100) target = $region20
      $region19: #{tpu_custom_call.1} parent=5 // pred_region
        // Predicated region
        $region21: #{tpu_custom_call.1} parent=19 // pred_check
          %p103 = pneg %p28
        $region22: #{tpu_custom_call.1} parent=19 // pred_check_branch
          %105 = sbr.rel (%p103) target = $region24
        $region23: #{tpu_custom_call.1} parent=19 // pred_region
          %s106 = smul.u32 63, %s8
          %s107 = ssub.s32 500, %s106
          %p108 = scmp.lt.s32.totalorder %s107, 63
          %s109 = scalar_select %p108, %s107, 63
          %s110 = smul.u32 128, %s109
          %p111 = scmp.lt.s32.totalorder %s106, 499
          %s112 = scalar_select %p111, %s106, 499
          %s113 = smul.addr %s112, 8
          %s114 = scalar_lea.vmem %s0, %s113
          %s115 = smul.u32 63, %s8
          %s116 = ssub.s32 500, %s115
          %p117 = scmp.lt.s32.totalorder %s116, 63
          %s118 = scalar_select %p117, %s116, 63
          %s119 = smul.u32 128, %s118
        $region24: #{tpu_custom_call.1} parent=19 // pred_fallthru
          _
      $region20: #{tpu_custom_call.1} parent=5 // pred_fallthru
        _
      %p120 = scmp.le.s32.totalorder 1, %s8
      %p121 = scmp.lt.s32.totalorder %s8, 9
      %p122 = pnand %p120, %p121
      %p123 = pneg %p122
      // Predicated region
      $region25: #{tpu_custom_call.1} parent=5 // pred_check
        _
      $region26: #{tpu_custom_call.1} parent=5 // pred_check_branch
        %125 = sbr.rel (%p122) target = $region28
      $region27: #{tpu_custom_call.1} parent=5 // pred_region
        %s126 = ssub.s32 %s8, 1
        %s127 = smul.u32 63, %s13
        %s128 = ssub.s32 500, %s127
        %p129 = scmp.lt.s32.totalorder %s128, 63
        %s130 = scalar_select %p129, %s128, 63
        %s131 = smul.u32 128, %s130
        %p132 = scmp.lt.s32.totalorder %s127, 499
        %s133 = scalar_select %p132, %s127, 499
        %s134 = smul.addr %s133, 8
        %s135 = scalar_lea.vmem %s0, %s134
        %p136 = pneg %p34
        %p137 = pneg %p31
        %p138 = pneg %p55
        %p139 = pneg %p52
        %p140 = pneg %p81
        %p141 = pneg %p78
        %s142 = sand.u32 %s68, 1
        %s143 = sand.u32 %s68, 1
        %s144 = smul.addr %s143, 504
        %s145 = scalar_lea.vmem [#allocation2], %s144
        %s146 = smul.u32 63, %s13
        %s147 = ssub.s32 500, %s146
        %p148 = scmp.lt.s32.totalorder %s147, 63
        %s149 = scalar_select %p148, %s147, 63
        %s150 = smul.u32 128, %s149
        %p151 = scmp.lt.s32.totalorder %s146, 499
        %s152 = scalar_select %p151, %s146, 499
        %s153 = smul.addr %s152, 8
        %s154 = scalar_lea.vmem %s0, %s153
        %s155 = smul.u32 63, %s13
        %s156 = ssub.s32 500, %s155
        %p157 = scmp.lt.s32.totalorder %s156, 63
        %s158 = scalar_select %p157, %s156, 63
        %s159 = smul.u32 128, %s158
        %s160 = smul.u32 63, %s13
        %s161 = ssub.s32 500, %s160
        %p162 = scmp.lt.s32.totalorder %s161, 63
        %s163 = scalar_select %p162, %s161, 63
        %s164 = smul.u32 128, %s163
        %v165 = vld [vmem:[%s154] sm:$0xff]
        %v166 = vld [vmem:[%s154 + $0x8] sm:$0xff]
        %v167 = vld [vmem:[%s154 + $0x10] sm:$0xff]
        %v168 = vld [vmem:[%s154 + $0x18] sm:$0xff]
        %v169 = vld [vmem:[%s154 + $0x20] sm:$0xff]
        %v170 = vld [vmem:[%s154 + $0x28] sm:$0xff]
        %v171 = vld [vmem:[%s154 + $0x30] sm:$0xff]
        %v172 = vld [vmem:[%s154 + $0x38] sm:$0xff]
        %v173 = vld [vmem:[%s154 + $0x40] sm:$0xff]
        %v174 = vld [vmem:[%s154 + $0x48] sm:$0xff]
        %v175 = vld [vmem:[%s154 + $0x50] sm:$0xff]
        %v176 = vld [vmem:[%s154 + $0x58] sm:$0xff]
        %v177 = vld [vmem:[%s154 + $0x60] sm:$0xff]
        %v178 = vld [vmem:[%s154 + $0x68] sm:$0xff]
        %v179 = vld [vmem:[%s154 + $0x70] sm:$0xff]
        %v180 = vld [vmem:[%s154 + $0x78] sm:$0xff]
        %v181 = vld [vmem:[%s154 + $0x80] sm:$0xff]
        %v182 = vld [vmem:[%s154 + $0x88] sm:$0xff]
        %v183 = vld [vmem:[%s154 + $0x90] sm:$0xff]
        %v184 = vld [vmem:[%s154 + $0x98] sm:$0xff]
        %v185 = vld [vmem:[%s154 + $0xa0] sm:$0xff]
        %v186 = vld [vmem:[%s154 + $0xa8] sm:$0xff]
        %v187 = vld [vmem:[%s154 + $0xb0] sm:$0xff]
        %v188 = vld [vmem:[%s154 + $0xb8] sm:$0xff]
        %v189 = vld [vmem:[%s154 + $0xc0] sm:$0xff]
        %v190 = vld [vmem:[%s154 + $0xc8] sm:$0xff]
        %v191 = vld [vmem:[%s154 + $0xd0] sm:$0xff]
        %v192 = vld [vmem:[%s154 + $0xd8] sm:$0xff]
        %v193 = vld [vmem:[%s154 + $0xe0] sm:$0xff]
        %v194 = vld [vmem:[%s154 + $0xe8] sm:$0xff]
        %v195 = vld [vmem:[%s154 + $0xf0] sm:$0xff]
        %v196 = vld [vmem:[%s154 + $0xf8] sm:$0xff]
        %v197 = vld [vmem:[%s154 + $0x100] sm:$0xff]
        %v198 = vld [vmem:[%s154 + $0x108] sm:$0xff]
        %v199 = vld [vmem:[%s154 + $0x110] sm:$0xff]
        %v200 = vld [vmem:[%s154 + $0x118] sm:$0xff]
        %v201 = vld [vmem:[%s154 + $0x120] sm:$0xff]
        %v202 = vld [vmem:[%s154 + $0x128] sm:$0xff]
        %v203 = vld [vmem:[%s154 + $0x130] sm:$0xff]
        %v204 = vld [vmem:[%s154 + $0x138] sm:$0xff]
        %v205 = vld [vmem:[%s154 + $0x140] sm:$0xff]
        %v206 = vld [vmem:[%s154 + $0x148] sm:$0xff]
        %v207 = vld [vmem:[%s154 + $0x150] sm:$0xff]
        %v208 = vld [vmem:[%s154 + $0x158] sm:$0xff]
        %v209 = vld [vmem:[%s154 + $0x160] sm:$0xff]
        %v210 = vld [vmem:[%s154 + $0x168] sm:$0xff]
        %v211 = vld [vmem:[%s154 + $0x170] sm:$0xff]
        %v212 = vld [vmem:[%s154 + $0x178] sm:$0xff]
        %v213 = vld [vmem:[%s154 + $0x180] sm:$0xff]
        %v214 = vld [vmem:[%s154 + $0x188] sm:$0xff]
        %v215 = vld [vmem:[%s154 + $0x190] sm:$0xff]
        %v216 = vld [vmem:[%s154 + $0x198] sm:$0xff]
        %v217 = vld [vmem:[%s154 + $0x1a0] sm:$0xff]
        %v218 = vld [vmem:[%s154 + $0x1a8] sm:$0xff]
        %v219 = vld [vmem:[%s154 + $0x1b0] sm:$0xff]
        %v220 = vld [vmem:[%s154 + $0x1b8] sm:$0xff]
        %v221 = vld [vmem:[%s154 + $0x1c0] sm:$0xff]
        %v222 = vld [vmem:[%s154 + $0x1c8] sm:$0xff]
        %v223 = vld [vmem:[%s154 + $0x1d0] sm:$0xff]
        %v224 = vld [vmem:[%s154 + $0x1d8] sm:$0xff]
        %v225 = vld [vmem:[%s154 + $0x1e0] sm:$0xff]
        %v226 = vld [vmem:[%s154 + $0x1e8] sm:$0xff]
        %v227 = vld [vmem:[%s154 + $0x1f0] sm:$0xff]
        %v228 = vld [vmem:[%s1] sm:$0xff]
        %v229 = vld [vmem:[%s1 + $0x8] sm:$0xff]
        %v230 = vld [vmem:[%s1 + $0x10] sm:$0xff]
        %v231 = vld [vmem:[%s1 + $0x18] sm:$0xff]
        %vm232 = vcmask 261120
        %v234 = vsel %vm232, %v165, 0
        %v237 = vsel %vm232, %v166, 0
        %v240 = vsel %vm232, %v167, 0
        %v243 = vsel %vm232, %v168, 0
        %v246 = vsel %vm232, %v169, 0
        %v249 = vsel %vm232, %v170, 0
        %v252 = vsel %vm232, %v171, 0
        %v255 = vsel %vm232, %v172, 0
        %v258 = vsel %vm232, %v173, 0
        %v261 = vsel %vm232, %v174, 0
        %v264 = vsel %vm232, %v175, 0
        %v267 = vsel %vm232, %v176, 0
        %v270 = vsel %vm232, %v177, 0
        %v273 = vsel %vm232, %v178, 0
        %v276 = vsel %vm232, %v179, 0
        %v279 = vsel %vm232, %v180, 0
        %v282 = vsel %vm232, %v181, 0
        %v285 = vsel %vm232, %v182, 0
        %v288 = vsel %vm232, %v183, 0
        %v291 = vsel %vm232, %v184, 0
        %v294 = vsel %vm232, %v185, 0
        %v297 = vsel %vm232, %v186, 0
        %v300 = vsel %vm232, %v187, 0
        %v303 = vsel %vm232, %v188, 0
        %v306 = vsel %vm232, %v189, 0
        %v309 = vsel %vm232, %v190, 0
        %v312 = vsel %vm232, %v191, 0
        %v315 = vsel %vm232, %v192, 0
        %v318 = vsel %vm232, %v193, 0
        %v321 = vsel %vm232, %v194, 0
        %v324 = vsel %vm232, %v195, 0
        %v327 = vsel %vm232, %v196, 0
        %v330 = vsel %vm232, %v197, 0
        %v333 = vsel %vm232, %v198, 0
        %v336 = vsel %vm232, %v199, 0
        %v339 = vsel %vm232, %v200, 0
        %v342 = vsel %vm232, %v201, 0
        %v345 = vsel %vm232, %v202, 0
        %v348 = vsel %vm232, %v203, 0
        %v351 = vsel %vm232, %v204, 0
        %v354 = vsel %vm232, %v205, 0
        %v357 = vsel %vm232, %v206, 0
        %v360 = vsel %vm232, %v207, 0
        %v363 = vsel %vm232, %v208, 0
        %v366 = vsel %vm232, %v209, 0
        %v369 = vsel %vm232, %v210, 0
        %v372 = vsel %vm232, %v211, 0
        %v375 = vsel %vm232, %v212, 0
        %v378 = vsel %vm232, %v213, 0
        %v381 = vsel %vm232, %v214, 0
        %v384 = vsel %vm232, %v215, 0
        %v387 = vsel %vm232, %v216, 0
        %v390 = vsel %vm232, %v217, 0
        %v393 = vsel %vm232, %v218, 0
        %v396 = vsel %vm232, %v219, 0
        %v399 = vsel %vm232, %v220, 0
        %v402 = vsel %vm232, %v221, 0
        %v405 = vsel %vm232, %v222, 0
        %v408 = vsel %vm232, %v223, 0
        %v411 = vsel %vm232, %v224, 0
        %v414 = vsel %vm232, %v225, 0
        %v417 = vsel %vm232, %v226, 0
        %v420 = vsel %vm232, %v227, 0
        %422 = vmatprep.subr.mxu0 0.0
        %423 = vmatpush1.msra.mxu0 0.0
        %424 = vmatprep.subr.mxu0 0.0
        %425 = vmatpush1.msra.mxu0 0.0
        %426 = vmatprep.subr.mxu0 0.0
        %427 = vmatpush1.msra.mxu0 0.0
        %428 = vmatprep.subr.mxu0 0.0
        %429 = vmatpush1.msra.mxu0 0.0
        %430 = vmatprep.subr.mxu0 0.0
        %431 = vmatpush1.msra.mxu0 0.0
        %432 = vmatprep.subr.mxu0 0.0
        %433 = vmatpush1.msra.mxu0 0.0
        %434 = vmatprep.subr.mxu0 0.0
        %435 = vmatpush1.msra.mxu0 0.0
        %436 = vmatprep.subr.mxu0 0.0
        %437 = vmatpush1.msra.mxu0 0.0
        %438 = vmatprep.subr.mxu0 0.0
        %439 = vmatpush1.msra.mxu0 0.0
        %440 = vmatprep.subr.mxu0 0.0
        %441 = vmatpush1.msra.mxu0 0.0
        %442 = vmatprep.subr.mxu0 0.0
        %443 = vmatpush1.msra.mxu0 0.0
        %444 = vmatprep.subr.mxu0 0.0
        %445 = vmatpush1.msra.mxu0 0.0
        %446 = vmatprep.subr.mxu0 0.0
        %447 = vmatpush1.msra.mxu0 %v231
        %448 = vmatprep.subr.mxu0 0.0
        %449 = vmatpush1.msra.mxu0 %v230
        %450 = vmatprep.subr.mxu0 0.0
        %451 = vmatpush1.msra.mxu0 %v229
        %452 = vmatprep.subr.mxu0 0.0
        %453 = vmatpush1.msra.mxu0 %v228
        %454 = vmatprep.subr.mxu0 0.0
        %455 = vmatpush2.msra.mxu0 0.0
        %456 = vmatprep.subr.mxu0 0.0
        %457 = vmatpush2.msra.mxu0 0.0
        %458 = vmatprep.subr.mxu0 0.0
        %459 = vmatpush2.msra.mxu0 0.0
        %460 = vmatprep.subr.mxu0 0.0
        %461 = vmatpush2.msra.mxu0 0.0
        %462 = vmatprep.subr.mxu0 0.0
        %463 = vmatpush2.msra.mxu0 0.0
        %464 = vmatprep.subr.mxu0 0.0
        %465 = vmatpush2.msra.mxu0 0.0
        %466 = vmatprep.subr.mxu0 0.0
        %467 = vmatpush2.msra.mxu0 0.0
        %468 = vmatprep.subr.mxu0 0.0
        %469 = vmatpush2.msra.mxu0 0.0
        %470 = vmatprep.subr.mxu0 0.0
        %471 = vmatpush2.msra.mxu0 0.0
        %472 = vmatprep.subr.mxu0 0.0
        %473 = vmatpush2.msra.mxu0 0.0
        %474 = vmatprep.subr.mxu0 0.0
        %475 = vmatpush2.msra.mxu0 0.0
        %476 = vmatprep.subr.mxu0 0.0
        %477 = vmatpush2.msra.mxu0 0.0
        %478 = vmatprep.subr.mxu0 0.0
        %479 = vmatpush2.msra.mxu0 0.0
        %480 = vmatprep.subr.mxu0 0.0
        %481 = vmatpush2.msra.mxu0 0.0
        %482 = vmatprep.subr.mxu0 0.0
        %483 = vmatpush2.msra.mxu0 0.0
        %484 = vmatprep.subr.mxu0 0.0
        %485 = vmatpush2.msra.mxu0 0.0
        %486 = vmatprep.mubr.f32.mxu0 0.0
        %487 = vmatmul.mubr.f32.gmra.mxu0 %v234
        %v488 = vpop.f32.mrf.mxu0
        %v489 = vadd.f32 0.0, %v488
        %v490 = vpop.f32.mrf.mxu0
        %491 = vmatprep.mubr.f32.mxu0 0.0
        %492 = vmatmul.mubr.f32.gmra.mxu0 %v237
        %v493 = vpop.f32.mrf.mxu0
        %v494 = vadd.f32 0.0, %v493
        %v495 = vpop.f32.mrf.mxu0
        %496 = vmatprep.mubr.f32.mxu0 0.0
        %497 = vmatmul.mubr.f32.gmra.mxu0 %v240
        %v498 = vpop.f32.mrf.mxu0
        %v499 = vadd.f32 0.0, %v498
        %v500 = vpop.f32.mrf.mxu0
        %501 = vmatprep.mubr.f32.mxu0 0.0
        %502 = vmatmul.mubr.f32.gmra.mxu0 %v243
        %v503 = vpop.f32.mrf.mxu0
        %v504 = vadd.f32 0.0, %v503
        %v505 = vpop.f32.mrf.mxu0
        %506 = vmatprep.mubr.f32.mxu0 0.0
        %507 = vmatmul.mubr.f32.gmra.mxu0 %v246
        %v508 = vpop.f32.mrf.mxu0
        %v509 = vadd.f32 0.0, %v508
        %v510 = vpop.f32.mrf.mxu0
        %511 = vmatprep.mubr.f32.mxu0 0.0
        %512 = vmatmul.mubr.f32.gmra.mxu0 %v249
        %v513 = vpop.f32.mrf.mxu0
        %v514 = vadd.f32 0.0, %v513
        %v515 = vpop.f32.mrf.mxu0
        %516 = vmatprep.mubr.f32.mxu0 0.0
        %517 = vmatmul.mubr.f32.gmra.mxu0 %v252
        %v518 = vpop.f32.mrf.mxu0
        %v519 = vadd.f32 0.0, %v518
        %v520 = vpop.f32.mrf.mxu0
        %521 = vmatprep.mubr.f32.mxu0 0.0
        %522 = vmatmul.mubr.f32.gmra.mxu0 %v255
        %v523 = vpop.f32.mrf.mxu0
        %v524 = vadd.f32 0.0, %v523
        %v525 = vpop.f32.mrf.mxu0
        %526 = vmatprep.mubr.f32.mxu0 0.0
        %527 = vmatmul.mubr.f32.gmra.mxu0 %v258
        %v528 = vpop.f32.mrf.mxu0
        %v529 = vadd.f32 0.0, %v528
        %v530 = vpop.f32.mrf.mxu0
        %531 = vmatprep.mubr.f32.mxu0 0.0
        %532 = vmatmul.mubr.f32.gmra.mxu0 %v261
        %v533 = vpop.f32.mrf.mxu0
        %v534 = vadd.f32 0.0, %v533
        %v535 = vpop.f32.mrf.mxu0
        %536 = vmatprep.mubr.f32.mxu0 0.0
        %537 = vmatmul.mubr.f32.gmra.mxu0 %v264
        %v538 = vpop.f32.mrf.mxu0
        %v539 = vadd.f32 0.0, %v538
        %v540 = vpop.f32.mrf.mxu0
        %541 = vmatprep.mubr.f32.mxu0 0.0
        %542 = vmatmul.mubr.f32.gmra.mxu0 %v267
        %v543 = vpop.f32.mrf.mxu0
        %v544 = vadd.f32 0.0, %v543
        %v545 = vpop.f32.mrf.mxu0
        %546 = vmatprep.mubr.f32.mxu0 0.0
        %547 = vmatmul.mubr.f32.gmra.mxu0 %v270
        %v548 = vpop.f32.mrf.mxu0
        %v549 = vadd.f32 0.0, %v548
        %v550 = vpop.f32.mrf.mxu0
        %551 = vmatprep.mubr.f32.mxu0 0.0
        %552 = vmatmul.mubr.f32.gmra.mxu0 %v273
        %v553 = vpop.f32.mrf.mxu0
        %v554 = vadd.f32 0.0, %v553
        %v555 = vpop.f32.mrf.mxu0
        %556 = vmatprep.mubr.f32.mxu0 0.0
        %557 = vmatmul.mubr.f32.gmra.mxu0 %v276
        %v558 = vpop.f32.mrf.mxu0
        %v559 = vadd.f32 0.0, %v558
        %v560 = vpop.f32.mrf.mxu0
        %561 = vmatprep.mubr.f32.mxu0 0.0
        %562 = vmatmul.mubr.f32.gmra.mxu0 %v279
        %v563 = vpop.f32.mrf.mxu0
        %v564 = vadd.f32 0.0, %v563
        %v565 = vpop.f32.mrf.mxu0
        %566 = vmatprep.mubr.f32.mxu0 0.0
        %567 = vmatmul.mubr.f32.gmra.mxu0 %v282
        %v568 = vpop.f32.mrf.mxu0
        %v569 = vadd.f32 0.0, %v568
        %v570 = vpop.f32.mrf.mxu0
        %571 = vmatprep.mubr.f32.mxu0 0.0
        %572 = vmatmul.mubr.f32.gmra.mxu0 %v285
        %v573 = vpop.f32.mrf.mxu0
        %v574 = vadd.f32 0.0, %v573
        %v575 = vpop.f32.mrf.mxu0
        %576 = vmatprep.mubr.f32.mxu0 0.0
        %577 = vmatmul.mubr.f32.gmra.mxu0 %v288
        %v578 = vpop.f32.mrf.mxu0
        %v579 = vadd.f32 0.0, %v578
        %v580 = vpop.f32.mrf.mxu0
        %581 = vmatprep.mubr.f32.mxu0 0.0
        %582 = vmatmul.mubr.f32.gmra.mxu0 %v291
        %v583 = vpop.f32.mrf.mxu0
        %v584 = vadd.f32 0.0, %v583
        %v585 = vpop.f32.mrf.mxu0
        %586 = vmatprep.mubr.f32.mxu0 0.0
        %587 = vmatmul.mubr.f32.gmra.mxu0 %v294
        %v588 = vpop.f32.mrf.mxu0
        %v589 = vadd.f32 0.0, %v588
        %v590 = vpop.f32.mrf.mxu0
        %591 = vmatprep.mubr.f32.mxu0 0.0
        %592 = vmatmul.mubr.f32.gmra.mxu0 %v297
        %v593 = vpop.f32.mrf.mxu0
        %v594 = vadd.f32 0.0, %v593
        %v595 = vpop.f32.mrf.mxu0
        %596 = vmatprep.mubr.f32.mxu0 0.0
        %597 = vmatmul.mubr.f32.gmra.mxu0 %v300
        %v598 = vpop.f32.mrf.mxu0
        %v599 = vadd.f32 0.0, %v598
        %v600 = vpop.f32.mrf.mxu0
        %601 = vmatprep.mubr.f32.mxu0 0.0
        %602 = vmatmul.mubr.f32.gmra.mxu0 %v303
        %v603 = vpop.f32.mrf.mxu0
        %v604 = vadd.f32 0.0, %v603
        %v605 = vpop.f32.mrf.mxu0
        %606 = vmatprep.mubr.f32.mxu0 0.0
        %607 = vmatmul.mubr.f32.gmra.mxu0 %v306
        %v608 = vpop.f32.mrf.mxu0
        %v609 = vadd.f32 0.0, %v608
        %v610 = vpop.f32.mrf.mxu0
        %611 = vmatprep.mubr.f32.mxu0 0.0
        %612 = vmatmul.mubr.f32.gmra.mxu0 %v309
        %v613 = vpop.f32.mrf.mxu0
        %v614 = vadd.f32 0.0, %v613
        %v615 = vpop.f32.mrf.mxu0
        %616 = vmatprep.mubr.f32.mxu0 0.0
        %617 = vmatmul.mubr.f32.gmra.mxu0 %v312
        %v618 = vpop.f32.mrf.mxu0
        %v619 = vadd.f32 0.0, %v618
        %v620 = vpop.f32.mrf.mxu0
        %621 = vmatprep.mubr.f32.mxu0 0.0
        %622 = vmatmul.mubr.f32.gmra.mxu0 %v315
        %v623 = vpop.f32.mrf.mxu0
        %v624 = vadd.f32 0.0, %v623
        %v625 = vpop.f32.mrf.mxu0
        %626 = vmatprep.mubr.f32.mxu0 0.0
        %627 = vmatmul.mubr.f32.gmra.mxu0 %v318
        %v628 = vpop.f32.mrf.mxu0
        %v629 = vadd.f32 0.0, %v628
        %v630 = vpop.f32.mrf.mxu0
        %631 = vmatprep.mubr.f32.mxu0 0.0
        %632 = vmatmul.mubr.f32.gmra.mxu0 %v321
        %v633 = vpop.f32.mrf.mxu0
        %v634 = vadd.f32 0.0, %v633
        %v635 = vpop.f32.mrf.mxu0
        %636 = vmatprep.mubr.f32.mxu0 0.0
        %637 = vmatmul.mubr.f32.gmra.mxu0 %v324
        %v638 = vpop.f32.mrf.mxu0
        %v639 = vadd.f32 0.0, %v638
        %v640 = vpop.f32.mrf.mxu0
        %641 = vmatprep.mubr.f32.mxu0 0.0
        %642 = vmatmul.mubr.f32.gmra.mxu0 %v327
        %v643 = vpop.f32.mrf.mxu0
        %v644 = vadd.f32 0.0, %v643
        %v645 = vpop.f32.mrf.mxu0
        %646 = vmatprep.mubr.f32.mxu0 0.0
        %647 = vmatmul.mubr.f32.gmra.mxu0 %v330
        %v648 = vpop.f32.mrf.mxu0
        %v649 = vadd.f32 0.0, %v648
        %v650 = vpop.f32.mrf.mxu0
        %651 = vmatprep.mubr.f32.mxu0 0.0
        %652 = vmatmul.mubr.f32.gmra.mxu0 %v333
        %v653 = vpop.f32.mrf.mxu0
        %v654 = vadd.f32 0.0, %v653
        %v655 = vpop.f32.mrf.mxu0
        %656 = vmatprep.mubr.f32.mxu0 0.0
        %657 = vmatmul.mubr.f32.gmra.mxu0 %v336
        %v658 = vpop.f32.mrf.mxu0
        %v659 = vadd.f32 0.0, %v658
        %v660 = vpop.f32.mrf.mxu0
        %661 = vmatprep.mubr.f32.mxu0 0.0
        %662 = vmatmul.mubr.f32.gmra.mxu0 %v339
        %v663 = vpop.f32.mrf.mxu0
        %v664 = vadd.f32 0.0, %v663
        %v665 = vpop.f32.mrf.mxu0
        %666 = vmatprep.mubr.f32.mxu0 0.0
        %667 = vmatmul.mubr.f32.gmra.mxu0 %v342
        %v668 = vpop.f32.mrf.mxu0
        %v669 = vadd.f32 0.0, %v668
        %v670 = vpop.f32.mrf.mxu0
        %671 = vmatprep.mubr.f32.mxu0 0.0
        %672 = vmatmul.mubr.f32.gmra.mxu0 %v345
        %v673 = vpop.f32.mrf.mxu0
        %v674 = vadd.f32 0.0, %v673
        %v675 = vpop.f32.mrf.mxu0
        %676 = vmatprep.mubr.f32.mxu0 0.0
        %677 = vmatmul.mubr.f32.gmra.mxu0 %v348
        %v678 = vpop.f32.mrf.mxu0
        %v679 = vadd.f32 0.0, %v678
        %v680 = vpop.f32.mrf.mxu0
        %681 = vmatprep.mubr.f32.mxu0 0.0
        %682 = vmatmul.mubr.f32.gmra.mxu0 %v351
        %v683 = vpop.f32.mrf.mxu0
        %v684 = vadd.f32 0.0, %v683
        %v685 = vpop.f32.mrf.mxu0
        %686 = vmatprep.mubr.f32.mxu0 0.0
        %687 = vmatmul.mubr.f32.gmra.mxu0 %v354
        %v688 = vpop.f32.mrf.mxu0
        %v689 = vadd.f32 0.0, %v688
        %v690 = vpop.f32.mrf.mxu0
        %691 = vmatprep.mubr.f32.mxu0 0.0
        %692 = vmatmul.mubr.f32.gmra.mxu0 %v357
        %v693 = vpop.f32.mrf.mxu0
        %v694 = vadd.f32 0.0, %v693
        %v695 = vpop.f32.mrf.mxu0
        %696 = vmatprep.mubr.f32.mxu0 0.0
        %697 = vmatmul.mubr.f32.gmra.mxu0 %v360
        %v698 = vpop.f32.mrf.mxu0
        %v699 = vadd.f32 0.0, %v698
        %v700 = vpop.f32.mrf.mxu0
        %701 = vmatprep.mubr.f32.mxu0 0.0
        %702 = vmatmul.mubr.f32.gmra.mxu0 %v363
        %v703 = vpop.f32.mrf.mxu0
        %v704 = vadd.f32 0.0, %v703
        %v705 = vpop.f32.mrf.mxu0
        %706 = vmatprep.mubr.f32.mxu0 0.0
        %707 = vmatmul.mubr.f32.gmra.mxu0 %v366
        %v708 = vpop.f32.mrf.mxu0
        %v709 = vadd.f32 0.0, %v708
        %v710 = vpop.f32.mrf.mxu0
        %711 = vmatprep.mubr.f32.mxu0 0.0
        %712 = vmatmul.mubr.f32.gmra.mxu0 %v369
        %v713 = vpop.f32.mrf.mxu0
        %v714 = vadd.f32 0.0, %v713
        %v715 = vpop.f32.mrf.mxu0
        %716 = vmatprep.mubr.f32.mxu0 0.0
        %717 = vmatmul.mubr.f32.gmra.mxu0 %v372
        %v718 = vpop.f32.mrf.mxu0
        %v719 = vadd.f32 0.0, %v718
        %v720 = vpop.f32.mrf.mxu0
        %721 = vmatprep.mubr.f32.mxu0 0.0
        %722 = vmatmul.mubr.f32.gmra.mxu0 %v375
        %v723 = vpop.f32.mrf.mxu0
        %v724 = vadd.f32 0.0, %v723
        %v725 = vpop.f32.mrf.mxu0
        %726 = vmatprep.mubr.f32.mxu0 0.0
        %727 = vmatmul.mubr.f32.gmra.mxu0 %v378
        %v728 = vpop.f32.mrf.mxu0
        %v729 = vadd.f32 0.0, %v728
        %v730 = vpop.f32.mrf.mxu0
        %731 = vmatprep.mubr.f32.mxu0 0.0
        %732 = vmatmul.mubr.f32.gmra.mxu0 %v381
        %v733 = vpop.f32.mrf.mxu0
        %v734 = vadd.f32 0.0, %v733
        %v735 = vpop.f32.mrf.mxu0
        %736 = vmatprep.mubr.f32.mxu0 0.0
        %737 = vmatmul.mubr.f32.gmra.mxu0 %v384
        %v738 = vpop.f32.mrf.mxu0
        %v739 = vadd.f32 0.0, %v738
        %v740 = vpop.f32.mrf.mxu0
        %741 = vmatprep.mubr.f32.mxu0 0.0
        %742 = vmatmul.mubr.f32.gmra.mxu0 %v387
        %v743 = vpop.f32.mrf.mxu0
        %v744 = vadd.f32 0.0, %v743
        %v745 = vpop.f32.mrf.mxu0
        %746 = vmatprep.mubr.f32.mxu0 0.0
        %747 = vmatmul.mubr.f32.gmra.mxu0 %v390
        %v748 = vpop.f32.mrf.mxu0
        %v749 = vadd.f32 0.0, %v748
        %v750 = vpop.f32.mrf.mxu0
        %751 = vmatprep.mubr.f32.mxu0 0.0
        %752 = vmatmul.mubr.f32.gmra.mxu0 %v393
        %v753 = vpop.f32.mrf.mxu0
        %v754 = vadd.f32 0.0, %v753
        %v755 = vpop.f32.mrf.mxu0
        %756 = vmatprep.mubr.f32.mxu0 0.0
        %757 = vmatmul.mubr.f32.gmra.mxu0 %v396
        %v758 = vpop.f32.mrf.mxu0
        %v759 = vadd.f32 0.0, %v758
        %v760 = vpop.f32.mrf.mxu0
        %761 = vmatprep.mubr.f32.mxu0 0.0
        %762 = vmatmul.mubr.f32.gmra.mxu0 %v399
        %v763 = vpop.f32.mrf.mxu0
        %v764 = vadd.f32 0.0, %v763
        %v765 = vpop.f32.mrf.mxu0
        %766 = vmatprep.mubr.f32.mxu0 0.0
        %767 = vmatmul.mubr.f32.gmra.mxu0 %v402
        %v768 = vpop.f32.mrf.mxu0
        %v769 = vadd.f32 0.0, %v768
        %v770 = vpop.f32.mrf.mxu0
        %771 = vmatprep.mubr.f32.mxu0 0.0
        %772 = vmatmul.mubr.f32.gmra.mxu0 %v405
        %v773 = vpop.f32.mrf.mxu0
        %v774 = vadd.f32 0.0, %v773
        %v775 = vpop.f32.mrf.mxu0
        %776 = vmatprep.mubr.f32.mxu0 0.0
        %777 = vmatmul.mubr.f32.gmra.mxu0 %v408
        %v778 = vpop.f32.mrf.mxu0
        %v779 = vadd.f32 0.0, %v778
        %v780 = vpop.f32.mrf.mxu0
        %781 = vmatprep.mubr.f32.mxu0 0.0
        %782 = vmatmul.mubr.f32.gmra.mxu0 %v411
        %v783 = vpop.f32.mrf.mxu0
        %v784 = vadd.f32 0.0, %v783
        %v785 = vpop.f32.mrf.mxu0
        %786 = vmatprep.mubr.f32.mxu0 0.0
        %787 = vmatmul.mubr.f32.gmra.mxu0 %v414
        %v788 = vpop.f32.mrf.mxu0
        %v789 = vadd.f32 0.0, %v788
        %v790 = vpop.f32.mrf.mxu0
        %791 = vmatprep.mubr.f32.mxu0 0.0
        %792 = vmatmul.mubr.f32.gmra.mxu0 %v417
        %v793 = vpop.f32.mrf.mxu0
        %v794 = vadd.f32 0.0, %v793
        %v795 = vpop.f32.mrf.mxu0
        %796 = vmatprep.mubr.f32.mxu0 0.0
        %797 = vmatmul.mubr.f32.gmra.mxu0 %v420
        %v798 = vpop.f32.mrf.mxu0
        %v799 = vadd.f32 0.0, %v798
        %v800 = vpop.f32.mrf.mxu0
        %801 = vdwg.mxu0
        %v802 = vtanh.pop %v489
        %v803 = vtanh.pop %v494
        %v804 = vtanh.pop %v499
        %v805 = vtanh.pop %v504
        %v806 = vtanh.pop %v509
        %v807 = vtanh.pop %v514
        %v808 = vtanh.pop %v519
        %v809 = vtanh.pop %v524
        %v810 = vtanh.pop %v529
        %v811 = vtanh.pop %v534
        %v812 = vtanh.pop %v539
        %v813 = vtanh.pop %v544
        %v814 = vtanh.pop %v549
        %v815 = vtanh.pop %v554
        %v816 = vtanh.pop %v559
        %v817 = vtanh.pop %v564
        %v818 = vtanh.pop %v569
        %v819 = vtanh.pop %v574
        %v820 = vtanh.pop %v579
        %v821 = vtanh.pop %v584
        %v822 = vtanh.pop %v589
        %v823 = vtanh.pop %v594
        %v824 = vtanh.pop %v599
        %v825 = vtanh.pop %v604
        %v826 = vtanh.pop %v609
        %v827 = vtanh.pop %v614
        %v828 = vtanh.pop %v619
        %v829 = vtanh.pop %v624
        %v830 = vtanh.pop %v629
        %v831 = vtanh.pop %v634
        %v832 = vtanh.pop %v639
        %v833 = vtanh.pop %v644
        %v834 = vtanh.pop %v649
        %v835 = vtanh.pop %v654
        %v836 = vtanh.pop %v659
        %v837 = vtanh.pop %v664
        %v838 = vtanh.pop %v669
        %v839 = vtanh.pop %v674
        %v840 = vtanh.pop %v679
        %v841 = vtanh.pop %v684
        %v842 = vtanh.pop %v689
        %v843 = vtanh.pop %v694
        %v844 = vtanh.pop %v699
        %v845 = vtanh.pop %v704
        %v846 = vtanh.pop %v709
        %v847 = vtanh.pop %v714
        %v848 = vtanh.pop %v719
        %v849 = vtanh.pop %v724
        %v850 = vtanh.pop %v729
        %v851 = vtanh.pop %v734
        %v852 = vtanh.pop %v739
        %v853 = vtanh.pop %v744
        %v854 = vtanh.pop %v749
        %v855 = vtanh.pop %v754
        %v856 = vtanh.pop %v759
        %v857 = vtanh.pop %v764
        %v858 = vtanh.pop %v769
        %v859 = vtanh.pop %v774
        %v860 = vtanh.pop %v779
        %v861 = vtanh.pop %v784
        %v862 = vtanh.pop %v789
        %v863 = vtanh.pop %v794
        %v864 = vtanh.pop %v799
        %866 = vset.pattern.permute.xlu0 0
        %867 = vperm.xlu0 %866, %v802
        %v868 = vpop.permute.xlu0 %867
        %871 = vset.pattern.permute.xlu0 0
        %872 = vperm.xlu0 %871, %v803
        %v873 = vpop.permute.xlu0 %872
        %876 = vset.pattern.permute.xlu0 0
        %877 = vperm.xlu0 %876, %v804
        %v878 = vpop.permute.xlu0 %877
        %881 = vset.pattern.permute.xlu0 0
        %882 = vperm.xlu0 %881, %v805
        %v883 = vpop.permute.xlu0 %882
        %886 = vset.pattern.permute.xlu0 0
        %887 = vperm.xlu0 %886, %v806
        %v888 = vpop.permute.xlu0 %887
        %891 = vset.pattern.permute.xlu0 0
        %892 = vperm.xlu0 %891, %v807
        %v893 = vpop.permute.xlu0 %892
        %896 = vset.pattern.permute.xlu0 0
        %897 = vperm.xlu0 %896, %v808
        %v898 = vpop.permute.xlu0 %897
        %901 = vset.pattern.permute.xlu0 0
        %902 = vperm.xlu0 %901, %v809
        %v903 = vpop.permute.xlu0 %902
        %906 = vset.pattern.permute.xlu0 0
        %907 = vperm.xlu0 %906, %v810
        %v908 = vpop.permute.xlu0 %907
        %911 = vset.pattern.permute.xlu0 0
        %912 = vperm.xlu0 %911, %v811
        %v913 = vpop.permute.xlu0 %912
        %916 = vset.pattern.permute.xlu0 0
        %917 = vperm.xlu0 %916, %v812
        %v918 = vpop.permute.xlu0 %917
        %921 = vset.pattern.permute.xlu0 0
        %922 = vperm.xlu0 %921, %v813
        %v923 = vpop.permute.xlu0 %922
        %926 = vset.pattern.permute.xlu0 0
        %927 = vperm.xlu0 %926, %v814
        %v928 = vpop.permute.xlu0 %927
        %931 = vset.pattern.permute.xlu0 0
        %932 = vperm.xlu0 %931, %v815
        %v933 = vpop.permute.xlu0 %932
        %936 = vset.pattern.permute.xlu0 0
        %937 = vperm.xlu0 %936, %v816
        %v938 = vpop.permute.xlu0 %937
        %941 = vset.pattern.permute.xlu0 0
        %942 = vperm.xlu0 %941, %v817
        %v943 = vpop.permute.xlu0 %942
        %946 = vset.pattern.permute.xlu0 0
        %947 = vperm.xlu0 %946, %v818
        %v948 = vpop.permute.xlu0 %947
        %951 = vset.pattern.permute.xlu0 0
        %952 = vperm.xlu0 %951, %v819
        %v953 = vpop.permute.xlu0 %952
        %956 = vset.pattern.permute.xlu0 0
        %957 = vperm.xlu0 %956, %v820
        %v958 = vpop.permute.xlu0 %957
        %961 = vset.pattern.permute.xlu0 0
        %962 = vperm.xlu0 %961, %v821
        %v963 = vpop.permute.xlu0 %962
        %966 = vset.pattern.permute.xlu0 0
        %967 = vperm.xlu0 %966, %v822
        %v968 = vpop.permute.xlu0 %967
        %971 = vset.pattern.permute.xlu0 0
        %972 = vperm.xlu0 %971, %v823
        %v973 = vpop.permute.xlu0 %972
        %976 = vset.pattern.permute.xlu0 0
        %977 = vperm.xlu0 %976, %v824
        %v978 = vpop.permute.xlu0 %977
        %981 = vset.pattern.permute.xlu0 0
        %982 = vperm.xlu0 %981, %v825
        %v983 = vpop.permute.xlu0 %982
        %986 = vset.pattern.permute.xlu0 0
        %987 = vperm.xlu0 %986, %v826
        %v988 = vpop.permute.xlu0 %987
        %991 = vset.pattern.permute.xlu0 0
        %992 = vperm.xlu0 %991, %v827
        %v993 = vpop.permute.xlu0 %992
        %996 = vset.pattern.permute.xlu0 0
        %997 = vperm.xlu0 %996, %v828
        %v998 = vpop.permute.xlu0 %997
        %1001 = vset.pattern.permute.xlu0 0
        %1002 = vperm.xlu0 %1001, %v829
        %v1003 = vpop.permute.xlu0 %1002
        %1006 = vset.pattern.permute.xlu0 0
        %1007 = vperm.xlu0 %1006, %v830
        %v1008 = vpop.permute.xlu0 %1007
        %1011 = vset.pattern.permute.xlu0 0
        %1012 = vperm.xlu0 %1011, %v831
        %v1013 = vpop.permute.xlu0 %1012
        %1016 = vset.pattern.permute.xlu0 0
        %1017 = vperm.xlu0 %1016, %v832
        %v1018 = vpop.permute.xlu0 %1017
        %1021 = vset.pattern.permute.xlu0 0
        %1022 = vperm.xlu0 %1021, %v833
        %v1023 = vpop.permute.xlu0 %1022
        %1026 = vset.pattern.permute.xlu0 0
        %1027 = vperm.xlu0 %1026, %v834
        %v1028 = vpop.permute.xlu0 %1027
        %1031 = vset.pattern.permute.xlu0 0
        %1032 = vperm.xlu0 %1031, %v835
        %v1033 = vpop.permute.xlu0 %1032
        %1036 = vset.pattern.permute.xlu0 0
        %1037 = vperm.xlu0 %1036, %v836
        %v1038 = vpop.permute.xlu0 %1037
        %1041 = vset.pattern.permute.xlu0 0
        %1042 = vperm.xlu0 %1041, %v837
        %v1043 = vpop.permute.xlu0 %1042
        %1046 = vset.pattern.permute.xlu0 0
        %1047 = vperm.xlu0 %1046, %v838
        %v1048 = vpop.permute.xlu0 %1047
        %1051 = vset.pattern.permute.xlu0 0
        %1052 = vperm.xlu0 %1051, %v839
        %v1053 = vpop.permute.xlu0 %1052
        %1056 = vset.pattern.permute.xlu0 0
        %1057 = vperm.xlu0 %1056, %v840
        %v1058 = vpop.permute.xlu0 %1057
        %1061 = vset.pattern.permute.xlu0 0
        %1062 = vperm.xlu0 %1061, %v841
        %v1063 = vpop.permute.xlu0 %1062
        %1066 = vset.pattern.permute.xlu0 0
        %1067 = vperm.xlu0 %1066, %v842
        %v1068 = vpop.permute.xlu0 %1067
        %1071 = vset.pattern.permute.xlu0 0
        %1072 = vperm.xlu0 %1071, %v843
        %v1073 = vpop.permute.xlu0 %1072
        %1076 = vset.pattern.permute.xlu0 0
        %1077 = vperm.xlu0 %1076, %v844
        %v1078 = vpop.permute.xlu0 %1077
        %1081 = vset.pattern.permute.xlu0 0
        %1082 = vperm.xlu0 %1081, %v845
        %v1083 = vpop.permute.xlu0 %1082
        %1086 = vset.pattern.permute.xlu0 0
        %1087 = vperm.xlu0 %1086, %v846
        %v1088 = vpop.permute.xlu0 %1087
        %1091 = vset.pattern.permute.xlu0 0
        %1092 = vperm.xlu0 %1091, %v847
        %v1093 = vpop.permute.xlu0 %1092
        %1096 = vset.pattern.permute.xlu0 0
        %1097 = vperm.xlu0 %1096, %v848
        %v1098 = vpop.permute.xlu0 %1097
        %1101 = vset.pattern.permute.xlu0 0
        %1102 = vperm.xlu0 %1101, %v849
        %v1103 = vpop.permute.xlu0 %1102
        %1106 = vset.pattern.permute.xlu0 0
        %1107 = vperm.xlu0 %1106, %v850
        %v1108 = vpop.permute.xlu0 %1107
        %1111 = vset.pattern.permute.xlu0 0
        %1112 = vperm.xlu0 %1111, %v851
        %v1113 = vpop.permute.xlu0 %1112
        %1116 = vset.pattern.permute.xlu0 0
        %1117 = vperm.xlu0 %1116, %v852
        %v1118 = vpop.permute.xlu0 %1117
        %1121 = vset.pattern.permute.xlu0 0
        %1122 = vperm.xlu0 %1121, %v853
        %v1123 = vpop.permute.xlu0 %1122
        %1126 = vset.pattern.permute.xlu0 0
        %1127 = vperm.xlu0 %1126, %v854
        %v1128 = vpop.permute.xlu0 %1127
        %1131 = vset.pattern.permute.xlu0 0
        %1132 = vperm.xlu0 %1131, %v855
        %v1133 = vpop.permute.xlu0 %1132
        %1136 = vset.pattern.permute.xlu0 0
        %1137 = vperm.xlu0 %1136, %v856
        %v1138 = vpop.permute.xlu0 %1137
        %1141 = vset.pattern.permute.xlu0 0
        %1142 = vperm.xlu0 %1141, %v857
        %v1143 = vpop.permute.xlu0 %1142
        %1146 = vset.pattern.permute.xlu0 0
        %1147 = vperm.xlu0 %1146, %v858
        %v1148 = vpop.permute.xlu0 %1147
        %1151 = vset.pattern.permute.xlu0 0
        %1152 = vperm.xlu0 %1151, %v859
        %v1153 = vpop.permute.xlu0 %1152
        %1156 = vset.pattern.permute.xlu0 0
        %1157 = vperm.xlu0 %1156, %v860
        %v1158 = vpop.permute.xlu0 %1157
        %1161 = vset.pattern.permute.xlu0 0
        %1162 = vperm.xlu0 %1161, %v861
        %v1163 = vpop.permute.xlu0 %1162
        %1166 = vset.pattern.permute.xlu0 0
        %1167 = vperm.xlu0 %1166, %v862
        %v1168 = vpop.permute.xlu0 %1167
        %1171 = vset.pattern.permute.xlu0 0
        %1172 = vperm.xlu0 %1171, %v863
        %v1173 = vpop.permute.xlu0 %1172
        %1176 = vset.pattern.permute.xlu0 0
        %1177 = vperm.xlu0 %1176, %v864
        %v1178 = vpop.permute.xlu0 %1177
        %v1180 = vmul.f32 %v165, %v868
        %v1181 = vmul.f32 %v166, %v873
        %v1182 = vmul.f32 %v167, %v878
        %v1183 = vmul.f32 %v168, %v883
        %v1184 = vmul.f32 %v169, %v888
        %v1185 = vmul.f32 %v170, %v893
        %v1186 = vmul.f32 %v171, %v898
        %v1187 = vmul.f32 %v172, %v903
        %v1188 = vmul.f32 %v173, %v908
        %v1189 = vmul.f32 %v174, %v913
        %v1190 = vmul.f32 %v175, %v918
        %v1191 = vmul.f32 %v176, %v923
        %v1192 = vmul.f32 %v177, %v928
        %v1193 = vmul.f32 %v178, %v933
        %v1194 = vmul.f32 %v179, %v938
        %v1195 = vmul.f32 %v180, %v943
        %v1196 = vmul.f32 %v181, %v948
        %v1197 = vmul.f32 %v182, %v953
        %v1198 = vmul.f32 %v183, %v958
        %v1199 = vmul.f32 %v184, %v963
        %v1200 = vmul.f32 %v185, %v968
        %v1201 = vmul.f32 %v186, %v973
        %v1202 = vmul.f32 %v187, %v978
        %v1203 = vmul.f32 %v188, %v983
        %v1204 = vmul.f32 %v189, %v988
        %v1205 = vmul.f32 %v190, %v993
        %v1206 = vmul.f32 %v191, %v998
        %v1207 = vmul.f32 %v192, %v1003
        %v1208 = vmul.f32 %v193, %v1008
        %v1209 = vmul.f32 %v194, %v1013
        %v1210 = vmul.f32 %v195, %v1018
        %v1211 = vmul.f32 %v196, %v1023
        %v1212 = vmul.f32 %v197, %v1028
        %v1213 = vmul.f32 %v198, %v1033
        %v1214 = vmul.f32 %v199, %v1038
        %v1215 = vmul.f32 %v200, %v1043
        %v1216 = vmul.f32 %v201, %v1048
        %v1217 = vmul.f32 %v202, %v1053
        %v1218 = vmul.f32 %v203, %v1058
        %v1219 = vmul.f32 %v204, %v1063
        %v1220 = vmul.f32 %v205, %v1068
        %v1221 = vmul.f32 %v206, %v1073
        %v1222 = vmul.f32 %v207, %v1078
        %v1223 = vmul.f32 %v208, %v1083
        %v1224 = vmul.f32 %v209, %v1088
        %v1225 = vmul.f32 %v210, %v1093
        %v1226 = vmul.f32 %v211, %v1098
        %v1227 = vmul.f32 %v212, %v1103
        %v1228 = vmul.f32 %v213, %v1108
        %v1229 = vmul.f32 %v214, %v1113
        %v1230 = vmul.f32 %v215, %v1118
        %v1231 = vmul.f32 %v216, %v1123
        %v1232 = vmul.f32 %v217, %v1128
        %v1233 = vmul.f32 %v218, %v1133
        %v1234 = vmul.f32 %v219, %v1138
        %v1235 = vmul.f32 %v220, %v1143
        %v1236 = vmul.f32 %v221, %v1148
        %v1237 = vmul.f32 %v222, %v1153
        %v1238 = vmul.f32 %v223, %v1158
        %v1239 = vmul.f32 %v224, %v1163
        %v1240 = vmul.f32 %v225, %v1168
        %v1241 = vmul.f32 %v226, %v1173
        %v1242 = vmul.f32 %v227, %v1178
        %1243 = vst.msk [vmem:[%s145] sm:$0xff] %vm232, %v1180
        %1244 = vst.msk [vmem:[%s145 + $0x8] sm:$0xff] %vm232, %v1181
        %1245 = vst.msk [vmem:[%s145 + $0x10] sm:$0xff] %vm232, %v1182
        %1246 = vst.msk [vmem:[%s145 + $0x18] sm:$0xff] %vm232, %v1183
        %1247 = vst.msk [vmem:[%s145 + $0x20] sm:$0xff] %vm232, %v1184
        %1248 = vst.msk [vmem:[%s145 + $0x28] sm:$0xff] %vm232, %v1185
        %1249 = vst.msk [vmem:[%s145 + $0x30] sm:$0xff] %vm232, %v1186
        %1250 = vst.msk [vmem:[%s145 + $0x38] sm:$0xff] %vm232, %v1187
        %1251 = vst.msk [vmem:[%s145 + $0x40] sm:$0xff] %vm232, %v1188
        %1252 = vst.msk [vmem:[%s145 + $0x48] sm:$0xff] %vm232, %v1189
        %1253 = vst.msk [vmem:[%s145 + $0x50] sm:$0xff] %vm232, %v1190
        %1254 = vst.msk [vmem:[%s145 + $0x58] sm:$0xff] %vm232, %v1191
        %1255 = vst.msk [vmem:[%s145 + $0x60] sm:$0xff] %vm232, %v1192
        %1256 = vst.msk [vmem:[%s145 + $0x68] sm:$0xff] %vm232, %v1193
        %1257 = vst.msk [vmem:[%s145 + $0x70] sm:$0xff] %vm232, %v1194
        %1258 = vst.msk [vmem:[%s145 + $0x78] sm:$0xff] %vm232, %v1195
        %1259 = vst.msk [vmem:[%s145 + $0x80] sm:$0xff] %vm232, %v1196
        %1260 = vst.msk [vmem:[%s145 + $0x88] sm:$0xff] %vm232, %v1197
        %1261 = vst.msk [vmem:[%s145 + $0x90] sm:$0xff] %vm232, %v1198
        %1262 = vst.msk [vmem:[%s145 + $0x98] sm:$0xff] %vm232, %v1199
        %1263 = vst.msk [vmem:[%s145 + $0xa0] sm:$0xff] %vm232, %v1200
        %1264 = vst.msk [vmem:[%s145 + $0xa8] sm:$0xff] %vm232, %v1201
        %1265 = vst.msk [vmem:[%s145 + $0xb0] sm:$0xff] %vm232, %v1202
        %1266 = vst.msk [vmem:[%s145 + $0xb8] sm:$0xff] %vm232, %v1203
        %1267 = vst.msk [vmem:[%s145 + $0xc0] sm:$0xff] %vm232, %v1204
        %1268 = vst.msk [vmem:[%s145 + $0xc8] sm:$0xff] %vm232, %v1205
        %1269 = vst.msk [vmem:[%s145 + $0xd0] sm:$0xff] %vm232, %v1206
        %1270 = vst.msk [vmem:[%s145 + $0xd8] sm:$0xff] %vm232, %v1207
        %1271 = vst.msk [vmem:[%s145 + $0xe0] sm:$0xff] %vm232, %v1208
        %1272 = vst.msk [vmem:[%s145 + $0xe8] sm:$0xff] %vm232, %v1209
        %1273 = vst.msk [vmem:[%s145 + $0xf0] sm:$0xff] %vm232, %v1210
        %1274 = vst.msk [vmem:[%s145 + $0xf8] sm:$0xff] %vm232, %v1211
        %1275 = vst.msk [vmem:[%s145 + $0x100] sm:$0xff] %vm232, %v1212
        %1276 = vst.msk [vmem:[%s145 + $0x108] sm:$0xff] %vm232, %v1213
        %1277 = vst.msk [vmem:[%s145 + $0x110] sm:$0xff] %vm232, %v1214
        %1278 = vst.msk [vmem:[%s145 + $0x118] sm:$0xff] %vm232, %v1215
        %1279 = vst.msk [vmem:[%s145 + $0x120] sm:$0xff] %vm232, %v1216
        %1280 = vst.msk [vmem:[%s145 + $0x128] sm:$0xff] %vm232, %v1217
        %1281 = vst.msk [vmem:[%s145 + $0x130] sm:$0xff] %vm232, %v1218
        %1282 = vst.msk [vmem:[%s145 + $0x138] sm:$0xff] %vm232, %v1219
        %1283 = vst.msk [vmem:[%s145 + $0x140] sm:$0xff] %vm232, %v1220
        %1284 = vst.msk [vmem:[%s145 + $0x148] sm:$0xff] %vm232, %v1221
        %1285 = vst.msk [vmem:[%s145 + $0x150] sm:$0xff] %vm232, %v1222
        %1286 = vst.msk [vmem:[%s145 + $0x158] sm:$0xff] %vm232, %v1223
        %1287 = vst.msk [vmem:[%s145 + $0x160] sm:$0xff] %vm232, %v1224
        %1288 = vst.msk [vmem:[%s145 + $0x168] sm:$0xff] %vm232, %v1225
        %1289 = vst.msk [vmem:[%s145 + $0x170] sm:$0xff] %vm232, %v1226
        %1290 = vst.msk [vmem:[%s145 + $0x178] sm:$0xff] %vm232, %v1227
        %1291 = vst.msk [vmem:[%s145 + $0x180] sm:$0xff] %vm232, %v1228
        %1292 = vst.msk [vmem:[%s145 + $0x188] sm:$0xff] %vm232, %v1229
        %1293 = vst.msk [vmem:[%s145 + $0x190] sm:$0xff] %vm232, %v1230
        %1294 = vst.msk [vmem:[%s145 + $0x198] sm:$0xff] %vm232, %v1231
        %1295 = vst.msk [vmem:[%s145 + $0x1a0] sm:$0xff] %vm232, %v1232
        %1296 = vst.msk [vmem:[%s145 + $0x1a8] sm:$0xff] %vm232, %v1233
        %1297 = vst.msk [vmem:[%s145 + $0x1b0] sm:$0xff] %vm232, %v1234
        %1298 = vst.msk [vmem:[%s145 + $0x1b8] sm:$0xff] %vm232, %v1235
        %1299 = vst.msk [vmem:[%s145 + $0x1c0] sm:$0xff] %vm232, %v1236
        %1300 = vst.msk [vmem:[%s145 + $0x1c8] sm:$0xff] %vm232, %v1237
        %1301 = vst.msk [vmem:[%s145 + $0x1d0] sm:$0xff] %vm232, %v1238
        %1302 = vst.msk [vmem:[%s145 + $0x1d8] sm:$0xff] %vm232, %v1239
        %1303 = vst.msk [vmem:[%s145 + $0x1e0] sm:$0xff] %vm232, %v1240
        %1304 = vst.msk [vmem:[%s145 + $0x1e8] sm:$0xff] %vm232, %v1241
        %1305 = vst.msk [vmem:[%s145 + $0x1f0] sm:$0xff] %vm232, %v1242
        %s1306 = sand.u32 %s68, 1
        %s1307 = sand.u32 %s68, 1
        %s1308 = smul.addr %s1307, 504
        %s1309 = scalar_lea.vmem [#allocation2], %s1308
        // Predicated region
        $region29: #{tpu_custom_call.1} parent=27 // pred_check
          %p1310 = pneg %p78
        $region30: #{tpu_custom_call.1} parent=27 // pred_check_branch
          %1312 = sbr.rel (%p1310) target = $region32
        $region31: #{tpu_custom_call.1} parent=27 // pred_region
          %s1313 = smul.u32 63, %s13
          %s1314 = ssub.s32 500, %s1313
          %p1315 = scmp.lt.s32.totalorder %s1314, 63
          %s1316 = scalar_select %p1315, %s1314, 63
          %s1317 = smul.u32 128, %s1316
          %p1318 = scmp.ne.s32.totalorder 0, %s1317
          %s1319 = smul.addr %s1313, 8
          %s1320 = scalar_lea.vmem %s2, %s1319
          // Predicated region
          $region33: #{tpu_custom_call.1} parent=31 // pred_check
            %p1321 = pneg %p1318
          $region34: #{tpu_custom_call.1} parent=31 // pred_check_branch
            %1323 = sbr.rel (%p1321) target = $region36
          $region35: #{tpu_custom_call.1} parent=31 // pred_region
            // Predicated region
            $region37: #{tpu_custom_call.1} parent=35 // pred_check
              _
            $region38: #{tpu_custom_call.1} parent=35 // pred_check_branch
              %1325 = sbr.rel (0) target = $region40
            $region39: #{tpu_custom_call.1} parent=35 // pred_region
              // Predicated region
              $region59: #{tpu_custom_call.1} parent=39 // pred_check
                _
              $region60: #{tpu_custom_call.1} parent=39 // pred_check_branch
                %1500 = sbr.rel (0) target = $region62
              $region61: #{tpu_custom_call.1} parent=39 // pred_region
                %s1501 = sdiv.u32.pop %s1316, 63
                %s1502 = srem.u32.pop %s1316, 63
                // While loop
                $region63: #{tpu_custom_call.1} parent=61 // loop_pre_header
                  _
                $region64: #{tpu_custom_call.1} parent=61 // loop_header
                  %s1504 = sphi 0, %s1506
                  %p1505 = scmp.ge.s32.totalorder %s1504, %s1501
                  %s1509 = sphi 0, %s1640
                  %s1510 = sphi %s1309, %s1643
                  %s1511 = sphi %s1320, %s1644
                $region65: #{tpu_custom_call.1} parent=61 // loop_header_branch
                  %1508 = sbr.rel (%p1505) target = $region69
                $region66: #{tpu_custom_call.1} parent=61 // loop_body
                  %v1512 = vld [vmem:[%s1510] sm:$0xff]
                  %1513 = vst [vmem:[%s1511] sm:$0xff] %v1512
                  %v1514 = vld [vmem:[%s1510 + $0x8] sm:$0xff]
                  %1515 = vst [vmem:[%s1511 + $0x8] sm:$0xff] %v1514
                  %v1516 = vld [vmem:[%s1510 + $0x10] sm:$0xff]
                  %1517 = vst [vmem:[%s1511 + $0x10] sm:$0xff] %v1516
                  %v1518 = vld [vmem:[%s1510 + $0x18] sm:$0xff]
                  %1519 = vst [vmem:[%s1511 + $0x18] sm:$0xff] %v1518
                  %v1520 = vld [vmem:[%s1510 + $0x20] sm:$0xff]
                  %1521 = vst [vmem:[%s1511 + $0x20] sm:$0xff] %v1520
                  %v1522 = vld [vmem:[%s1510 + $0x28] sm:$0xff]
                  %1523 = vst [vmem:[%s1511 + $0x28] sm:$0xff] %v1522
                  %v1524 = vld [vmem:[%s1510 + $0x30] sm:$0xff]
                  %1525 = vst [vmem:[%s1511 + $0x30] sm:$0xff] %v1524
                  %v1526 = vld [vmem:[%s1510 + $0x38] sm:$0xff]
                  %1527 = vst [vmem:[%s1511 + $0x38] sm:$0xff] %v1526
                  %v1528 = vld [vmem:[%s1510 + $0x40] sm:$0xff]
                  %1529 = vst [vmem:[%s1511 + $0x40] sm:$0xff] %v1528
                  %v1530 = vld [vmem:[%s1510 + $0x48] sm:$0xff]
                  %1531 = vst [vmem:[%s1511 + $0x48] sm:$0xff] %v1530
                  %v1532 = vld [vmem:[%s1510 + $0x50] sm:$0xff]
                  %1533 = vst [vmem:[%s1511 + $0x50] sm:$0xff] %v1532
                  %v1534 = vld [vmem:[%s1510 + $0x58] sm:$0xff]
                  %1535 = vst [vmem:[%s1511 + $0x58] sm:$0xff] %v1534
                  %v1536 = vld [vmem:[%s1510 + $0x60] sm:$0xff]
                  %1537 = vst [vmem:[%s1511 + $0x60] sm:$0xff] %v1536
                  %v1538 = vld [vmem:[%s1510 + $0x68] sm:$0xff]
                  %1539 = vst [vmem:[%s1511 + $0x68] sm:$0xff] %v1538
                  %v1540 = vld [vmem:[%s1510 + $0x70] sm:$0xff]
                  %1541 = vst [vmem:[%s1511 + $0x70] sm:$0xff] %v1540
                  %v1542 = vld [vmem:[%s1510 + $0x78] sm:$0xff]
                  %1543 = vst [vmem:[%s1511 + $0x78] sm:$0xff] %v1542
                  %v1544 = vld [vmem:[%s1510 + $0x80] sm:$0xff]
                  %1545 = vst [vmem:[%s1511 + $0x80] sm:$0xff] %v1544
                  %v1546 = vld [vmem:[%s1510 + $0x88] sm:$0xff]
                  %1547 = vst [vmem:[%s1511 + $0x88] sm:$0xff] %v1546
                  %v1548 = vld [vmem:[%s1510 + $0x90] sm:$0xff]
                  %1549 = vst [vmem:[%s1511 + $0x90] sm:$0xff] %v1548
                  %v1550 = vld [vmem:[%s1510 + $0x98] sm:$0xff]
                  %1551 = vst [vmem:[%s1511 + $0x98] sm:$0xff] %v1550
                  %v1552 = vld [vmem:[%s1510 + $0xa0] sm:$0xff]
                  %1553 = vst [vmem:[%s1511 + $0xa0] sm:$0xff] %v1552
                  %v1554 = vld [vmem:[%s1510 + $0xa8] sm:$0xff]
                  %1555 = vst [vmem:[%s1511 + $0xa8] sm:$0xff] %v1554
                  %v1556 = vld [vmem:[%s1510 + $0xb0] sm:$0xff]
                  %1557 = vst [vmem:[%s1511 + $0xb0] sm:$0xff] %v1556
                  %v1558 = vld [vmem:[%s1510 + $0xb8] sm:$0xff]
                  %1559 = vst [vmem:[%s1511 + $0xb8] sm:$0xff] %v1558
                  %v1560 = vld [vmem:[%s1510 + $0xc0] sm:$0xff]
                  %1561 = vst [vmem:[%s1511 + $0xc0] sm:$0xff] %v1560
                  %v1562 = vld [vmem:[%s1510 + $0xc8] sm:$0xff]
                  %1563 = vst [vmem:[%s1511 + $0xc8] sm:$0xff] %v1562
                  %v1564 = vld [vmem:[%s1510 + $0xd0] sm:$0xff]
                  %1565 = vst [vmem:[%s1511 + $0xd0] sm:$0xff] %v1564
                  %v1566 = vld [vmem:[%s1510 + $0xd8] sm:$0xff]
                  %1567 = vst [vmem:[%s1511 + $0xd8] sm:$0xff] %v1566
                  %v1568 = vld [vmem:[%s1510 + $0xe0] sm:$0xff]
                  %1569 = vst [vmem:[%s1511 + $0xe0] sm:$0xff] %v1568
                  %v1570 = vld [vmem:[%s1510 + $0xe8] sm:$0xff]
                  %1571 = vst [vmem:[%s1511 + $0xe8] sm:$0xff] %v1570
                  %v1572 = vld [vmem:[%s1510 + $0xf0] sm:$0xff]
                  %1573 = vst [vmem:[%s1511 + $0xf0] sm:$0xff] %v1572
                  %v1574 = vld [vmem:[%s1510 + $0xf8] sm:$0xff]
                  %1575 = vst [vmem:[%s1511 + $0xf8] sm:$0xff] %v1574
                  %v1576 = vld [vmem:[%s1510 + $0x100] sm:$0xff]
                  %1577 = vst [vmem:[%s1511 + $0x100] sm:$0xff] %v1576
                  %v1578 = vld [vmem:[%s1510 + $0x108] sm:$0xff]
                  %1579 = vst [vmem:[%s1511 + $0x108] sm:$0xff] %v1578
                  %v1580 = vld [vmem:[%s1510 + $0x110] sm:$0xff]
                  %1581 = vst [vmem:[%s1511 + $0x110] sm:$0xff] %v1580
                  %v1582 = vld [vmem:[%s1510 + $0x118] sm:$0xff]
                  %1583 = vst [vmem:[%s1511 + $0x118] sm:$0xff] %v1582
                  %v1584 = vld [vmem:[%s1510 + $0x120] sm:$0xff]
                  %1585 = vst [vmem:[%s1511 + $0x120] sm:$0xff] %v1584
                  %v1586 = vld [vmem:[%s1510 + $0x128] sm:$0xff]
                  %1587 = vst [vmem:[%s1511 + $0x128] sm:$0xff] %v1586
                  %v1588 = vld [vmem:[%s1510 + $0x130] sm:$0xff]
                  %1589 = vst [vmem:[%s1511 + $0x130] sm:$0xff] %v1588
                  %v1590 = vld [vmem:[%s1510 + $0x138] sm:$0xff]
                  %1591 = vst [vmem:[%s1511 + $0x138] sm:$0xff] %v1590
                  %v1592 = vld [vmem:[%s1510 + $0x140] sm:$0xff]
                  %1593 = vst [vmem:[%s1511 + $0x140] sm:$0xff] %v1592
                  %v1594 = vld [vmem:[%s1510 + $0x148] sm:$0xff]
                  %1595 = vst [vmem:[%s1511 + $0x148] sm:$0xff] %v1594
                  %v1596 = vld [vmem:[%s1510 + $0x150] sm:$0xff]
                  %1597 = vst [vmem:[%s1511 + $0x150] sm:$0xff] %v1596
                  %v1598 = vld [vmem:[%s1510 + $0x158] sm:$0xff]
                  %1599 = vst [vmem:[%s1511 + $0x158] sm:$0xff] %v1598
                  %v1600 = vld [vmem:[%s1510 + $0x160] sm:$0xff]
                  %1601 = vst [vmem:[%s1511 + $0x160] sm:$0xff] %v1600
                  %v1602 = vld [vmem:[%s1510 + $0x168] sm:$0xff]
                  %1603 = vst [vmem:[%s1511 + $0x168] sm:$0xff] %v1602
                  %v1604 = vld [vmem:[%s1510 + $0x170] sm:$0xff]
                  %1605 = vst [vmem:[%s1511 + $0x170] sm:$0xff] %v1604
                  %v1606 = vld [vmem:[%s1510 + $0x178] sm:$0xff]
                  %1607 = vst [vmem:[%s1511 + $0x178] sm:$0xff] %v1606
                  %v1608 = vld [vmem:[%s1510 + $0x180] sm:$0xff]
                  %1609 = vst [vmem:[%s1511 + $0x180] sm:$0xff] %v1608
                  %v1610 = vld [vmem:[%s1510 + $0x188] sm:$0xff]
                  %1611 = vst [vmem:[%s1511 + $0x188] sm:$0xff] %v1610
                  %v1612 = vld [vmem:[%s1510 + $0x190] sm:$0xff]
                  %1613 = vst [vmem:[%s1511 + $0x190] sm:$0xff] %v1612
                  %v1614 = vld [vmem:[%s1510 + $0x198] sm:$0xff]
                  %1615 = vst [vmem:[%s1511 + $0x198] sm:$0xff] %v1614
                  %v1616 = vld [vmem:[%s1510 + $0x1a0] sm:$0xff]
                  %1617 = vst [vmem:[%s1511 + $0x1a0] sm:$0xff] %v1616
                  %v1618 = vld [vmem:[%s1510 + $0x1a8] sm:$0xff]
                  %1619 = vst [vmem:[%s1511 + $0x1a8] sm:$0xff] %v1618
                  %v1620 = vld [vmem:[%s1510 + $0x1b0] sm:$0xff]
                  %1621 = vst [vmem:[%s1511 + $0x1b0] sm:$0xff] %v1620
                  %v1622 = vld [vmem:[%s1510 + $0x1b8] sm:$0xff]
                  %1623 = vst [vmem:[%s1511 + $0x1b8] sm:$0xff] %v1622
                  %v1624 = vld [vmem:[%s1510 + $0x1c0] sm:$0xff]
                  %1625 = vst [vmem:[%s1511 + $0x1c0] sm:$0xff] %v1624
                  %v1626 = vld [vmem:[%s1510 + $0x1c8] sm:$0xff]
                  %1627 = vst [vmem:[%s1511 + $0x1c8] sm:$0xff] %v1626
                  %v1628 = vld [vmem:[%s1510 + $0x1d0] sm:$0xff]
                  %1629 = vst [vmem:[%s1511 + $0x1d0] sm:$0xff] %v1628
                  %v1630 = vld [vmem:[%s1510 + $0x1d8] sm:$0xff]
                  %1631 = vst [vmem:[%s1511 + $0x1d8] sm:$0xff] %v1630
                  %v1632 = vld [vmem:[%s1510 + $0x1e0] sm:$0xff]
                  %1633 = vst [vmem:[%s1511 + $0x1e0] sm:$0xff] %v1632
                  %v1634 = vld [vmem:[%s1510 + $0x1e8] sm:$0xff]
                  %1635 = vst [vmem:[%s1511 + $0x1e8] sm:$0xff] %v1634
                  %v1636 = vld [vmem:[%s1510 + $0x1f0] sm:$0xff]
                  %1637 = vst [vmem:[%s1511 + $0x1f0] sm:$0xff] %v1636
                  %s1638 = sadd.s32 1, %s1509
                  %p1639 = scmp.ge.s32.totalorder %s1638, %s1501
                  %s1640 = scalar_select %p1639, 0, %s1638
                  %s1641 = smul.u32 %s1640, 504
                  %s1642 = smul.u32 %s1640, 504
                  %s1643 = scalar_lea.vmem %s1309, %s1641 [#allocation2]
                  %s1644 = scalar_lea.vmem %s1320, %s1642
                $region67: #{tpu_custom_call.1} parent=61 // loop_footer
                  %s1506 = sadd.s32 %s1504, 1
                $region68: #{tpu_custom_call.1} parent=61 // loop_footer_branch
                  %1503 = sbr.rel target = $region64
                $region69: #{tpu_custom_call.1} parent=61 // loop_exit
                  _
                %s1645 = sdiv.u32.pop %s1316, 63
                %s1646 = srem.u32.pop %s1316, 63
                %s1647 = smul.u32 %s1645, 63
                %s1648 = smul.u32 8, %s1647
                %s1649 = scalar_lea.vmem %s1309, %s1648 [#allocation2]
                %s1650 = smul.u32 8, %s1647
                %s1651 = scalar_lea.vmem %s1320, %s1650
                // While loop
                $region70: #{tpu_custom_call.1} parent=61 // loop_pre_header
                  _
                $region71: #{tpu_custom_call.1} parent=61 // loop_header
                  %s1653 = sphi 0, %s1655
                  %p1654 = scmp.ge.s32.totalorder %s1653, %s1646
                  %s1658 = sphi 0, %s1665
                  %s1659 = sphi %s1649, %s1668
                  %s1660 = sphi %s1651, %s1669
                $region72: #{tpu_custom_call.1} parent=61 // loop_header_branch
                  %1657 = sbr.rel (%p1654) target = $region76
                $region73: #{tpu_custom_call.1} parent=61 // loop_body
                  %v1661 = vld [vmem:[%s1659] sm:$0xff]
                  %1662 = vst [vmem:[%s1660] sm:$0xff] %v1661
                  %s1663 = sadd.s32 1, %s1658
                  %p1664 = scmp.ge.s32.totalorder %s1663, %s1646
                  %s1665 = scalar_select %p1664, 0, %s1663
                  %s1666 = smul.u32 %s1665, 8
                  %s1667 = smul.u32 %s1665, 8
                  %s1668 = scalar_lea.vmem %s1649, %s1666 [#allocation2]
                  %s1669 = scalar_lea.vmem %s1651, %s1667
                $region74: #{tpu_custom_call.1} parent=61 // loop_footer
                  %s1655 = sadd.s32 %s1653, 1
                $region75: #{tpu_custom_call.1} parent=61 // loop_footer_branch
                  %1652 = sbr.rel target = $region71
                $region76: #{tpu_custom_call.1} parent=61 // loop_exit
                  _
              $region62: #{tpu_custom_call.1} parent=39 // pred_fallthru
                _
              // Predicated region
              $region77: #{tpu_custom_call.1} parent=39 // pred_check
                _
              $region78: #{tpu_custom_call.1} parent=39 // pred_check_branch
                %1671 = sbr.rel target = $region80
              $region79: #{tpu_custom_call.1} parent=39 // pred_region
                _
              $region80: #{tpu_custom_call.1} parent=39 // pred_fallthru
                _
            $region40: #{tpu_custom_call.1} parent=35 // pred_fallthru
              _
            // Predicated region
            $region41: #{tpu_custom_call.1} parent=35 // pred_check
              _
            $region42: #{tpu_custom_call.1} parent=35 // pred_check_branch
              %1327 = sbr.rel target = $region44
            $region43: #{tpu_custom_call.1} parent=35 // pred_region
              %s1329 = ssub.s32 256, 1
              %s1330 = sdiv.u32.pop %s1316, 63
              %s1331 = srem.u32.pop %s1316, 63
              // While loop
              $region45: #{tpu_custom_call.1} parent=43 // loop_pre_header
                _
              $region46: #{tpu_custom_call.1} parent=43 // loop_header
                %s1333 = sphi 0, %s1335
                %p1334 = scmp.ge.s32.totalorder %s1333, %s1330
                %s1338 = sphi 0, %s1469
                %s1339 = sphi %s1309, %s1472
                %s1340 = sphi %s1320, %s1473
              $region47: #{tpu_custom_call.1} parent=43 // loop_header_branch
                %1337 = sbr.rel (%p1334) target = $region51
              $region48: #{tpu_custom_call.1} parent=43 // loop_body
                %v1341 = vld [vmem:[%s1339] sm:%s1329]
                %1342 = vst [vmem:[%s1340] sm:%s1329] %v1341
                %v1343 = vld [vmem:[%s1339 + $0x8] sm:%s1329]
                %1344 = vst [vmem:[%s1340 + $0x8] sm:%s1329] %v1343
                %v1345 = vld [vmem:[%s1339 + $0x10] sm:%s1329]
                %1346 = vst [vmem:[%s1340 + $0x10] sm:%s1329] %v1345
                %v1347 = vld [vmem:[%s1339 + $0x18] sm:%s1329]
                %1348 = vst [vmem:[%s1340 + $0x18] sm:%s1329] %v1347
                %v1349 = vld [vmem:[%s1339 + $0x20] sm:%s1329]
                %1350 = vst [vmem:[%s1340 + $0x20] sm:%s1329] %v1349
                %v1351 = vld [vmem:[%s1339 + $0x28] sm:%s1329]
                %1352 = vst [vmem:[%s1340 + $0x28] sm:%s1329] %v1351
                %v1353 = vld [vmem:[%s1339 + $0x30] sm:%s1329]
                %1354 = vst [vmem:[%s1340 + $0x30] sm:%s1329] %v1353
                %v1355 = vld [vmem:[%s1339 + $0x38] sm:%s1329]
                %1356 = vst [vmem:[%s1340 + $0x38] sm:%s1329] %v1355
                %v1357 = vld [vmem:[%s1339 + $0x40] sm:%s1329]
                %1358 = vst [vmem:[%s1340 + $0x40] sm:%s1329] %v1357
                %v1359 = vld [vmem:[%s1339 + $0x48] sm:%s1329]
                %1360 = vst [vmem:[%s1340 + $0x48] sm:%s1329] %v1359
                %v1361 = vld [vmem:[%s1339 + $0x50] sm:%s1329]
                %1362 = vst [vmem:[%s1340 + $0x50] sm:%s1329] %v1361
                %v1363 = vld [vmem:[%s1339 + $0x58] sm:%s1329]
                %1364 = vst [vmem:[%s1340 + $0x58] sm:%s1329] %v1363
                %v1365 = vld [vmem:[%s1339 + $0x60] sm:%s1329]
                %1366 = vst [vmem:[%s1340 + $0x60] sm:%s1329] %v1365
                %v1367 = vld [vmem:[%s1339 + $0x68] sm:%s1329]
                %1368 = vst [vmem:[%s1340 + $0x68] sm:%s1329] %v1367
                %v1369 = vld [vmem:[%s1339 + $0x70] sm:%s1329]
                %1370 = vst [vmem:[%s1340 + $0x70] sm:%s1329] %v1369
                %v1371 = vld [vmem:[%s1339 + $0x78] sm:%s1329]
                %1372 = vst [vmem:[%s1340 + $0x78] sm:%s1329] %v1371
                %v1373 = vld [vmem:[%s1339 + $0x80] sm:%s1329]
                %1374 = vst [vmem:[%s1340 + $0x80] sm:%s1329] %v1373
                %v1375 = vld [vmem:[%s1339 + $0x88] sm:%s1329]
                %1376 = vst [vmem:[%s1340 + $0x88] sm:%s1329] %v1375
                %v1377 = vld [vmem:[%s1339 + $0x90] sm:%s1329]
                %1378 = vst [vmem:[%s1340 + $0x90] sm:%s1329] %v1377
                %v1379 = vld [vmem:[%s1339 + $0x98] sm:%s1329]
                %1380 = vst [vmem:[%s1340 + $0x98] sm:%s1329] %v1379
                %v1381 = vld [vmem:[%s1339 + $0xa0] sm:%s1329]
                %1382 = vst [vmem:[%s1340 + $0xa0] sm:%s1329] %v1381
                %v1383 = vld [vmem:[%s1339 + $0xa8] sm:%s1329]
                %1384 = vst [vmem:[%s1340 + $0xa8] sm:%s1329] %v1383
                %v1385 = vld [vmem:[%s1339 + $0xb0] sm:%s1329]
                %1386 = vst [vmem:[%s1340 + $0xb0] sm:%s1329] %v1385
                %v1387 = vld [vmem:[%s1339 + $0xb8] sm:%s1329]
                %1388 = vst [vmem:[%s1340 + $0xb8] sm:%s1329] %v1387
                %v1389 = vld [vmem:[%s1339 + $0xc0] sm:%s1329]
                %1390 = vst [vmem:[%s1340 + $0xc0] sm:%s1329] %v1389
                %v1391 = vld [vmem:[%s1339 + $0xc8] sm:%s1329]
                %1392 = vst [vmem:[%s1340 + $0xc8] sm:%s1329] %v1391
                %v1393 = vld [vmem:[%s1339 + $0xd0] sm:%s1329]
                %1394 = vst [vmem:[%s1340 + $0xd0] sm:%s1329] %v1393
                %v1395 = vld [vmem:[%s1339 + $0xd8] sm:%s1329]
                %1396 = vst [vmem:[%s1340 + $0xd8] sm:%s1329] %v1395
                %v1397 = vld [vmem:[%s1339 + $0xe0] sm:%s1329]
                %1398 = vst [vmem:[%s1340 + $0xe0] sm:%s1329] %v1397
                %v1399 = vld [vmem:[%s1339 + $0xe8] sm:%s1329]
                %1400 = vst [vmem:[%s1340 + $0xe8] sm:%s1329] %v1399
                %v1401 = vld [vmem:[%s1339 + $0xf0] sm:%s1329]
                %1402 = vst [vmem:[%s1340 + $0xf0] sm:%s1329] %v1401
                %v1403 = vld [vmem:[%s1339 + $0xf8] sm:%s1329]
                %1404 = vst [vmem:[%s1340 + $0xf8] sm:%s1329] %v1403
                %v1405 = vld [vmem:[%s1339 + $0x100] sm:%s1329]
                %1406 = vst [vmem:[%s1340 + $0x100] sm:%s1329] %v1405
                %v1407 = vld [vmem:[%s1339 + $0x108] sm:%s1329]
                %1408 = vst [vmem:[%s1340 + $0x108] sm:%s1329] %v1407
                %v1409 = vld [vmem:[%s1339 + $0x110] sm:%s1329]
                %1410 = vst [vmem:[%s1340 + $0x110] sm:%s1329] %v1409
                %v1411 = vld [vmem:[%s1339 + $0x118] sm:%s1329]
                %1412 = vst [vmem:[%s1340 + $0x118] sm:%s1329] %v1411
                %v1413 = vld [vmem:[%s1339 + $0x120] sm:%s1329]
                %1414 = vst [vmem:[%s1340 + $0x120] sm:%s1329] %v1413
                %v1415 = vld [vmem:[%s1339 + $0x128] sm:%s1329]
                %1416 = vst [vmem:[%s1340 + $0x128] sm:%s1329] %v1415
                %v1417 = vld [vmem:[%s1339 + $0x130] sm:%s1329]
                %1418 = vst [vmem:[%s1340 + $0x130] sm:%s1329] %v1417
                %v1419 = vld [vmem:[%s1339 + $0x138] sm:%s1329]
                %1420 = vst [vmem:[%s1340 + $0x138] sm:%s1329] %v1419
                %v1421 = vld [vmem:[%s1339 + $0x140] sm:%s1329]
                %1422 = vst [vmem:[%s1340 + $0x140] sm:%s1329] %v1421
                %v1423 = vld [vmem:[%s1339 + $0x148] sm:%s1329]
                %1424 = vst [vmem:[%s1340 + $0x148] sm:%s1329] %v1423
                %v1425 = vld [vmem:[%s1339 + $0x150] sm:%s1329]
                %1426 = vst [vmem:[%s1340 + $0x150] sm:%s1329] %v1425
                %v1427 = vld [vmem:[%s1339 + $0x158] sm:%s1329]
                %1428 = vst [vmem:[%s1340 + $0x158] sm:%s1329] %v1427
                %v1429 = vld [vmem:[%s1339 + $0x160] sm:%s1329]
                %1430 = vst [vmem:[%s1340 + $0x160] sm:%s1329] %v1429
                %v1431 = vld [vmem:[%s1339 + $0x168] sm:%s1329]
                %1432 = vst [vmem:[%s1340 + $0x168] sm:%s1329] %v1431
                %v1433 = vld [vmem:[%s1339 + $0x170] sm:%s1329]
                %1434 = vst [vmem:[%s1340 + $0x170] sm:%s1329] %v1433
                %v1435 = vld [vmem:[%s1339 + $0x178] sm:%s1329]
                %1436 = vst [vmem:[%s1340 + $0x178] sm:%s1329] %v1435
                %v1437 = vld [vmem:[%s1339 + $0x180] sm:%s1329]
                %1438 = vst [vmem:[%s1340 + $0x180] sm:%s1329] %v1437
                %v1439 = vld [vmem:[%s1339 + $0x188] sm:%s1329]
                %1440 = vst [vmem:[%s1340 + $0x188] sm:%s1329] %v1439
                %v1441 = vld [vmem:[%s1339 + $0x190] sm:%s1329]
                %1442 = vst [vmem:[%s1340 + $0x190] sm:%s1329] %v1441
                %v1443 = vld [vmem:[%s1339 + $0x198] sm:%s1329]
                %1444 = vst [vmem:[%s1340 + $0x198] sm:%s1329] %v1443
                %v1445 = vld [vmem:[%s1339 + $0x1a0] sm:%s1329]
                %1446 = vst [vmem:[%s1340 + $0x1a0] sm:%s1329] %v1445
                %v1447 = vld [vmem:[%s1339 + $0x1a8] sm:%s1329]
                %1448 = vst [vmem:[%s1340 + $0x1a8] sm:%s1329] %v1447
                %v1449 = vld [vmem:[%s1339 + $0x1b0] sm:%s1329]
                %1450 = vst [vmem:[%s1340 + $0x1b0] sm:%s1329] %v1449
                %v1451 = vld [vmem:[%s1339 + $0x1b8] sm:%s1329]
                %1452 = vst [vmem:[%s1340 + $0x1b8] sm:%s1329] %v1451
                %v1453 = vld [vmem:[%s1339 + $0x1c0] sm:%s1329]
                %1454 = vst [vmem:[%s1340 + $0x1c0] sm:%s1329] %v1453
                %v1455 = vld [vmem:[%s1339 + $0x1c8] sm:%s1329]
                %1456 = vst [vmem:[%s1340 + $0x1c8] sm:%s1329] %v1455
                %v1457 = vld [vmem:[%s1339 + $0x1d0] sm:%s1329]
                %1458 = vst [vmem:[%s1340 + $0x1d0] sm:%s1329] %v1457
                %v1459 = vld [vmem:[%s1339 + $0x1d8] sm:%s1329]
                %1460 = vst [vmem:[%s1340 + $0x1d8] sm:%s1329] %v1459
                %v1461 = vld [vmem:[%s1339 + $0x1e0] sm:%s1329]
                %1462 = vst [vmem:[%s1340 + $0x1e0] sm:%s1329] %v1461
                %v1463 = vld [vmem:[%s1339 + $0x1e8] sm:%s1329]
                %1464 = vst [vmem:[%s1340 + $0x1e8] sm:%s1329] %v1463
                %v1465 = vld [vmem:[%s1339 + $0x1f0] sm:%s1329]
                %1466 = vst [vmem:[%s1340 + $0x1f0] sm:%s1329] %v1465
                %s1467 = sadd.s32 1, %s1338
                %p1468 = scmp.ge.s32.totalorder %s1467, %s1330
                %s1469 = scalar_select %p1468, 0, %s1467
                %s1470 = smul.u32 %s1469, 504
                %s1471 = smul.u32 %s1469, 504
                %s1472 = scalar_lea.vmem %s1309, %s1470 [#allocation2]
                %s1473 = scalar_lea.vmem %s1320, %s1471
              $region49: #{tpu_custom_call.1} parent=43 // loop_footer
                %s1335 = sadd.s32 %s1333, 1
              $region50: #{tpu_custom_call.1} parent=43 // loop_footer_branch
                %1332 = sbr.rel target = $region46
              $region51: #{tpu_custom_call.1} parent=43 // loop_exit
                _
              %s1474 = sdiv.u32.pop %s1316, 63
              %s1475 = srem.u32.pop %s1316, 63
              %s1476 = smul.u32 %s1474, 63
              %s1477 = smul.u32 8, %s1476
              %s1478 = scalar_lea.vmem %s1309, %s1477 [#allocation2]
              %s1479 = smul.u32 8, %s1476
              %s1480 = scalar_lea.vmem %s1320, %s1479
              // While loop
              $region52: #{tpu_custom_call.1} parent=43 // loop_pre_header
                _
              $region53: #{tpu_custom_call.1} parent=43 // loop_header
                %s1482 = sphi 0, %s1484
                %p1483 = scmp.ge.s32.totalorder %s1482, %s1475
                %s1487 = sphi 0, %s1494
                %s1488 = sphi %s1478, %s1497
                %s1489 = sphi %s1480, %s1498
              $region54: #{tpu_custom_call.1} parent=43 // loop_header_branch
                %1486 = sbr.rel (%p1483) target = $region58
              $region55: #{tpu_custom_call.1} parent=43 // loop_body
                %v1490 = vld [vmem:[%s1488] sm:%s1329]
                %1491 = vst [vmem:[%s1489] sm:%s1329] %v1490
                %s1492 = sadd.s32 1, %s1487
                %p1493 = scmp.ge.s32.totalorder %s1492, %s1475
                %s1494 = scalar_select %p1493, 0, %s1492
                %s1495 = smul.u32 %s1494, 8
                %s1496 = smul.u32 %s1494, 8
                %s1497 = scalar_lea.vmem %s1478, %s1495 [#allocation2]
                %s1498 = scalar_lea.vmem %s1480, %s1496
              $region56: #{tpu_custom_call.1} parent=43 // loop_footer
                %s1484 = sadd.s32 %s1482, 1
              $region57: #{tpu_custom_call.1} parent=43 // loop_footer_branch
                %1481 = sbr.rel target = $region53
              $region58: #{tpu_custom_call.1} parent=43 // loop_exit
                _
            $region44: #{tpu_custom_call.1} parent=35 // pred_fallthru
              _
          $region36: #{tpu_custom_call.1} parent=31 // pred_fallthru
            _
          %1672 = vnop
        $region32: #{tpu_custom_call.1} parent=27 // pred_fallthru
          _
      $region28: #{tpu_custom_call.1} parent=5 // pred_fallthru
        _
      %p1673 = scmp.le.s32.totalorder 2, %s8
      // Predicated region
      $region81: #{tpu_custom_call.1} parent=5 // pred_check
        %p1674 = pneg %p1673
      $region82: #{tpu_custom_call.1} parent=5 // pred_check_branch
        %1676 = sbr.rel (%p1674) target = $region84
      $region83: #{tpu_custom_call.1} parent=5 // pred_region
        %s1677 = ssub.s32 %s8, 2
        // Predicated region
        $region85: #{tpu_custom_call.1} parent=83 // pred_check
          %p1678 = pneg %p84
        $region86: #{tpu_custom_call.1} parent=83 // pred_check_branch
          %1680 = sbr.rel (%p1678) target = $region88
        $region87: #{tpu_custom_call.1} parent=83 // pred_region
          %s1681 = sand.u32 %s69, 1
          %s1682 = sand.u32 %s69, 1
          %s1683 = smul.addr %s1682, 504
          %s1684 = scalar_lea.vmem [#allocation2], %s1683
        $region88: #{tpu_custom_call.1} parent=83 // pred_fallthru
          _
      $region84: #{tpu_custom_call.1} parent=5 // pred_fallthru
        _
    $region6: #{tpu_custom_call.1} parent=1 // loop_footer
      %s12 = sadd.s32 1, %s8
    $region7: #{tpu_custom_call.1} parent=1 // loop_footer_branch
      %7 = sbr.rel target = $region3
    $region8: #{tpu_custom_call.1} parent=1 // loop_exit
      _

</llo_original>
